<compile_context>
chip_gen: v7x
topology: tpu7x:2x2x1
jax: 0.10.0
libtpu: 0.0.40
codegen_flags: <defaults>
</compile_context>

<pallas_src>
import functools

import jax
import jax.numpy as jnp
from jax.experimental import pallas as pl
from jax.experimental.pallas import tpu as pltpu

_SELU_ALPHA = 1.6732632423543772
_SELU_SCALE = 1.0507009873554805


def _selu(x):
    # scale * (x if x > 0 else alpha * (exp(x) - 1)); exp runs on the EUP.
    return _SELU_SCALE * jnp.where(x > 0, x, _SELU_ALPHA * (jnp.exp(x) - 1.0))


def _round_up(x, m):
    return ((x + m - 1) // m) * m


def _co_action_kernel(a_ref, p_ref, out_ref, *, hidden_size, use_bias,
                      apply_final_act):
    """Per-example micro-MLP with batch on the lane axis.

    a_ref  : (D1, S, Bt)          item features, batch on lanes
    p_ref  : (total_params, Bt)   packed per-example weights/biases (transposed)
    out_ref: (D_out, S, Bt)
    """
    n_layers = len(hidden_size) - 1
    d1 = hidden_size[0]

    # Current layer inputs as a list of lane-dense (S, Bt) f32 tiles.
    h = [a_ref[i].astype(jnp.float32) for i in range(d1)]

    idx = 0
    for layer in range(n_layers):
        d_in, d_out = hidden_size[layer], hidden_size[layer + 1]
        w_base = idx
        idx += d_in * d_out
        b_base = idx
        if use_bias:
            idx += d_out
        is_last = layer == n_layers - 1
        act = (not is_last) or apply_final_act

        outs = []
        for j in range(d_out):
            # Weight column j for all examples: static (1, Bt) row slices of
            # the packed-param tile, sublane-broadcast against (S, Bt) tiles.
            w = [
                p_ref[w_base + i * d_out + j:w_base + i * d_out + j + 1, :]
                .astype(jnp.float32)
                for i in range(d_in)
            ]
            # Two independent accumulation chains hide VALU latency.
            acc0 = h[0] * w[0]
            acc1 = h[1] * w[1] if d_in > 1 else None
            for i in range(2, d_in, 2):
                acc0 = acc0 + h[i] * w[i]
            for i in range(3, d_in, 2):
                acc1 = acc1 + h[i] * w[i]
            acc = acc0 if acc1 is None else acc0 + acc1
            if use_bias:
                acc = acc + p_ref[b_base + j:b_base + j + 1, :].astype(
                    jnp.float32)
            if act:
                acc = _selu(acc)
            outs.append(acc)

        if is_last:
            # Lane-dense, unmasked stores: one (S, Bt) slab per output feature.
            for j in range(d_out):
                out_ref[j] = outs[j].astype(out_ref.dtype)
        else:
            h = outs


def co_action_layer(input_a, input_b, *, in_shape_list, hidden_units=(8, 4),
                    apply_final_act=False, use_bias=True, block_b=1024):
    """Pallas forward pass of CoActionLayer.

    input_a: (B, S, D1) or (B, D1)
    input_b: (B, D2) with D2 >= total_params
    returns: (B, S, hidden_units[-1]) or (B, hidden_units[-1])
    """
    d1 = int(in_shape_list[0])
    hidden_size = [d1] + [int(h) for h in hidden_units]
    n_layers = len(hidden_size) - 1
    total_params = sum(
        (hidden_size[i] + (1 if use_bias else 0)) * hidden_size[i + 1]
        for i in range(n_layers))
    assert input_b.shape[-1] >= total_params, (
        f"input_b last dim must be at least {total_params}")

    need_reshape_back = input_a.ndim <= 2
    if need_reshape_back:
        input_a = input_a[:, None, :]
    B, S, D = input_a.shape
    assert D == d1
    out_dim = hidden_size[-1]

    # ---- layout plumbing (XLA): put the batch on the 128-wide lane axis ----
    a_t = jnp.transpose(input_a, (2, 1, 0))                  # (D1, S, B)
    p_t = jnp.transpose(input_b[:, :total_params], (1, 0))   # (P,  B)

    # ---- batch block size (lanes). No padding copy: ragged last block is
    # clipped by Pallas; its garbage lanes only produce discarded outputs. ----
    if B <= 128:
        bt = B                                  # single block, full-dim lane
    else:
        # multiple of 128; cap so the grid keeps >= 2 steps (v7x: 2 TCs)
        cap = _round_up(-(-B // 2), 128)
        bt = max(128, (min(block_b, cap) // 128) * 128)
    grid_b = -(-B // bt)

    out_shape = jax.ShapeDtypeStruct((out_dim, S, B), input_a.dtype)

    # ---- advisory cost model (actual element sizes, no padded-B term) ----
    flops = 2 * B * S * sum(hidden_size[i] * hidden_size[i + 1]
                            for i in range(n_layers))
    act_layers = n_layers if apply_final_act else max(n_layers - 1, 0)
    transcendentals = B * S * sum(hidden_size[i + 1]
                                  for i in range(act_layers))
    bytes_accessed = (input_a.dtype.itemsize * B * S * d1
                      + input_b.dtype.itemsize * B * total_params
                      + input_a.dtype.itemsize * B * S * out_dim)

    kernel = functools.partial(_co_action_kernel, hidden_size=hidden_size,
                               use_bias=use_bias,
                               apply_final_act=apply_final_act)

    out_t = pl.pallas_call(
        kernel,
        out_shape=out_shape,
        grid_spec=pltpu.PrefetchScalarGridSpec(
            num_scalar_prefetch=0,
            grid=(grid_b,),
            in_specs=[
                pl.BlockSpec((d1, S, bt), lambda b: (0, 0, b)),
                pl.BlockSpec((total_params, bt), lambda b: (0, b)),
            ],
            out_specs=pl.BlockSpec((out_dim, S, bt), lambda b: (0, 0, b)),
        ),
        compiler_params=pltpu.CompilerParams(
            dimension_semantics=("parallel",),
            # Per-step working set is ~1-2 MiB; 32 MiB is safe on v5e/v6e/v7x.
            vmem_limit_bytes=32 * 1024 * 1024),
        cost_estimate=pl.CostEstimate(flops=flops,
                                      transcendentals=transcendentals,
                                      bytes_accessed=bytes_accessed),
    )(a_t, p_t)

    out = jnp.transpose(out_t, (2, 1, 0))        # (B, S, out_dim)
    if need_reshape_back:
        out = out[:, 0, :]
    return out


def reference(input_a, input_b, *, in_shape_list, hidden_units=(8, 4),
              apply_final_act=False, use_bias=True):
    """Pure-JAX reference matching the PyTorch CoActionLayer.forward."""
    d1 = int(in_shape_list[0])
    hidden_size = [d1] + [int(h) for h in hidden_units]
    n_layers = len(hidden_size) - 1
    B = input_b.shape[0]
    need_back = input_a.ndim <= 2
    h = input_a[:, None, :] if need_back else input_a
    idx = 0
    for i in range(n_layers):
        prev_u, last_u = hidden_size[i], hidden_size[i + 1]
        w = input_b[:, idx:idx + prev_u * last_u].reshape(B, prev_u, last_u)
        idx += prev_u * last_u
        h = jnp.einsum('bsd,bde->bse', h, w)
        if use_bias:
            b = input_b[:, idx:idx + last_u].reshape(B, 1, last_u)
            idx += last_u
            h = h + b
        if i < n_layers - 1 or apply_final_act:
            h = _SELU_SCALE * jnp.where(h > 0, h,
                                        _SELU_ALPHA * (jnp.exp(h) - 1.0))
    return h[:, 0, :] if need_back else h


if __name__ == "__main__":
    key = jax.random.PRNGKey(0)
    k_a, k_b, k_a2, k_a3, k_b3 = jax.random.split(key, 5)

    # in_shape_list = [dim1, dim2] with dim2 >> dim1; hidden_units = [8, 4]
    # total_params = (8+1)*8 + (8+1)*4 = 108 <= 128
    B, S = 2, 8
    in_shape_list = [8, 128]
    hidden_units = (8, 4)

    input_a = jax.random.normal(k_a, (B, S, in_shape_list[0]), jnp.float32)
    input_b = 0.3 * jax.random.normal(k_b, (B, in_shape_list[1]), jnp.float32)

    # 3-D input_a path
    out = co_action_layer(input_a, input_b, in_shape_list=in_shape_list,
                          hidden_units=hidden_units)
    out = jax.block_until_ready(out)
    ref = reference(input_a, input_b, in_shape_list=in_shape_list,
                    hidden_units=hidden_units)
    assert out.shape == (B, S, hidden_units[-1])
    assert jnp.allclose(out, ref, atol=1e-4, rtol=1e-4), (
        f"max abs err {jnp.max(jnp.abs(out - ref))}")

    # 2-D input_a path (unsqueeze / squeeze round trip)
    input_a2 = jax.random.normal(k_a2, (B, in_shape_list[0]), jnp.float32)
    out2 = co_action_layer(input_a2, input_b, in_shape_list=in_shape_list,
                           hidden_units=hidden_units)
    out2 = jax.block_until_ready(out2)
    ref2 = reference(input_a2, input_b, in_shape_list=in_shape_list,
                     hidden_units=hidden_units)
    assert out2.shape == (B, hidden_units[-1])
    assert jnp.allclose(out2, ref2, atol=1e-4, rtol=1e-4), (
        f"max abs err {jnp.max(jnp.abs(out2 - ref2))}")

    # Multi-block + ragged-last-block path (B=192 -> two 128-lane blocks).
    B3 = 192
    input_a3 = jax.random.normal(k_a3, (B3, S, in_shape_list[0]), jnp.float32)
    input_b3 = 0.3 * jax.random.normal(k_b3, (B3, in_shape_list[1]),
                                       jnp.float32)
    out3 = co_action_layer(input_a3, input_b3, in_shape_list=in_shape_list,
                           hidden_units=hidden_units)
    out3 = jax.block_until_ready(out3)
    ref3 = reference(input_a3, input_b3, in_shape_list=in_shape_list,
                     hidden_units=hidden_units)
    assert out3.shape == (B3, S, hidden_units[-1])
    assert jnp.allclose(out3, ref3, atol=1e-4, rtol=1e-4), (
        f"max abs err {jnp.max(jnp.abs(out3 - ref3))}")

    print("KERNEL_OK")
</pallas_src>

<mosaic_0001>
module attributes {stable_mosaic.version = 11 : i64} {
  func.func @_co_action_kernel(%arg0: i32, %arg1: memref<8x8x2xf32, #tpu.memory_space<vmem>>, %arg2: memref<108x2xf32, #tpu.memory_space<vmem>>, %arg3: memref<4x8x2xf32, #tpu.memory_space<vmem>>) attributes {dimension_semantics = [#tpu.dimension_semantics<parallel>], iteration_bounds = array<i64: 1>, scalar_prefetch = 0 : i64, scratch_operands = 0 : i64, tpu.core_type = #tpu.core_type<tc>, window_params = [{transform_indices = @transform_0, window_bounds = array<i64: 8, 8, 2>}, {transform_indices = @transform_1, window_bounds = array<i64: 108, 2>}, {transform_indices = @transform_2, window_bounds = array<i64: 4, 8, 2>}]} {
    %c0 = arith.constant 0 : index
    %c0_0 = arith.constant 0 : index
    %c0_1 = arith.constant 0 : index
    %0 = vector.load %arg1[%c0, %c0_0, %c0_1] : memref<8x8x2xf32, #tpu.memory_space<vmem>>, vector<1x8x2xf32>
    %1 = vector.shape_cast %0 : vector<1x8x2xf32> to vector<8x2xf32>
    %c1 = arith.constant 1 : index
    %c0_2 = arith.constant 0 : index
    %c0_3 = arith.constant 0 : index
    %2 = vector.load %arg1[%c1, %c0_2, %c0_3] : memref<8x8x2xf32, #tpu.memory_space<vmem>>, vector<1x8x2xf32>
    %3 = vector.shape_cast %2 : vector<1x8x2xf32> to vector<8x2xf32>
    %c2 = arith.constant 2 : index
    %c0_4 = arith.constant 0 : index
    %c0_5 = arith.constant 0 : index
    %4 = vector.load %arg1[%c2, %c0_4, %c0_5] : memref<8x8x2xf32, #tpu.memory_space<vmem>>, vector<1x8x2xf32>
    %5 = vector.shape_cast %4 : vector<1x8x2xf32> to vector<8x2xf32>
    %c3 = arith.constant 3 : index
    %c0_6 = arith.constant 0 : index
    %c0_7 = arith.constant 0 : index
    %6 = vector.load %arg1[%c3, %c0_6, %c0_7] : memref<8x8x2xf32, #tpu.memory_space<vmem>>, vector<1x8x2xf32>
    %7 = vector.shape_cast %6 : vector<1x8x2xf32> to vector<8x2xf32>
    %c4 = arith.constant 4 : index
    %c0_8 = arith.constant 0 : index
    %c0_9 = arith.constant 0 : index
    %8 = vector.load %arg1[%c4, %c0_8, %c0_9] : memref<8x8x2xf32, #tpu.memory_space<vmem>>, vector<1x8x2xf32>
    %9 = vector.shape_cast %8 : vector<1x8x2xf32> to vector<8x2xf32>
    %c5 = arith.constant 5 : index
    %c0_10 = arith.constant 0 : index
    %c0_11 = arith.constant 0 : index
    %10 = vector.load %arg1[%c5, %c0_10, %c0_11] : memref<8x8x2xf32, #tpu.memory_space<vmem>>, vector<1x8x2xf32>
    %11 = vector.shape_cast %10 : vector<1x8x2xf32> to vector<8x2xf32>
    %c6 = arith.constant 6 : index
    %c0_12 = arith.constant 0 : index
    %c0_13 = arith.constant 0 : index
    %12 = vector.load %arg1[%c6, %c0_12, %c0_13] : memref<8x8x2xf32, #tpu.memory_space<vmem>>, vector<1x8x2xf32>
    %13 = vector.shape_cast %12 : vector<1x8x2xf32> to vector<8x2xf32>
    %c7 = arith.constant 7 : index
    %c0_14 = arith.constant 0 : index
    %c0_15 = arith.constant 0 : index
    %14 = vector.load %arg1[%c7, %c0_14, %c0_15] : memref<8x8x2xf32, #tpu.memory_space<vmem>>, vector<1x8x2xf32>
    %15 = vector.shape_cast %14 : vector<1x8x2xf32> to vector<8x2xf32>
    %c0_16 = arith.constant 0 : index
    %c0_17 = arith.constant 0 : index
    %16 = vector.load %arg2[%c0_16, %c0_17] : memref<108x2xf32, #tpu.memory_space<vmem>>, vector<1x2xf32>
    %c8 = arith.constant 8 : index
    %c0_18 = arith.constant 0 : index
    %17 = vector.load %arg2[%c8, %c0_18] : memref<108x2xf32, #tpu.memory_space<vmem>>, vector<1x2xf32>
    %c16 = arith.constant 16 : index
    %c0_19 = arith.constant 0 : index
    %18 = vector.load %arg2[%c16, %c0_19] : memref<108x2xf32, #tpu.memory_space<vmem>>, vector<1x2xf32>
    %c24 = arith.constant 24 : index
    %c0_20 = arith.constant 0 : index
    %19 = vector.load %arg2[%c24, %c0_20] : memref<108x2xf32, #tpu.memory_space<vmem>>, vector<1x2xf32>
    %c32 = arith.constant 32 : index
    %c0_21 = arith.constant 0 : index
    %20 = vector.load %arg2[%c32, %c0_21] : memref<108x2xf32, #tpu.memory_space<vmem>>, vector<1x2xf32>
    %c40 = arith.constant 40 : index
    %c0_22 = arith.constant 0 : index
    %21 = vector.load %arg2[%c40, %c0_22] : memref<108x2xf32, #tpu.memory_space<vmem>>, vector<1x2xf32>
    %c48 = arith.constant 48 : index
    %c0_23 = arith.constant 0 : index
    %22 = vector.load %arg2[%c48, %c0_23] : memref<108x2xf32, #tpu.memory_space<vmem>>, vector<1x2xf32>
    %c56 = arith.constant 56 : index
    %c0_24 = arith.constant 0 : index
    %23 = vector.load %arg2[%c56, %c0_24] : memref<108x2xf32, #tpu.memory_space<vmem>>, vector<1x2xf32>
    %24 = vector.broadcast %16 : vector<1x2xf32> to vector<8x2xf32>
    %25 = arith.mulf %1, %24 : vector<8x2xf32>
    %26 = vector.broadcast %17 : vector<1x2xf32> to vector<8x2xf32>
    %27 = arith.mulf %3, %26 : vector<8x2xf32>
    %28 = vector.broadcast %18 : vector<1x2xf32> to vector<8x2xf32>
    %29 = arith.mulf %5, %28 : vector<8x2xf32>
    %30 = arith.addf %25, %29 : vector<8x2xf32>
    %31 = vector.broadcast %20 : vector<1x2xf32> to vector<8x2xf32>
    %32 = arith.mulf %9, %31 : vector<8x2xf32>
    %33 = arith.addf %30, %32 : vector<8x2xf32>
    %34 = vector.broadcast %22 : vector<1x2xf32> to vector<8x2xf32>
    %35 = arith.mulf %13, %34 : vector<8x2xf32>
    %36 = arith.addf %33, %35 : vector<8x2xf32>
    %37 = vector.broadcast %19 : vector<1x2xf32> to vector<8x2xf32>
    %38 = arith.mulf %7, %37 : vector<8x2xf32>
    %39 = arith.addf %27, %38 : vector<8x2xf32>
    %40 = vector.broadcast %21 : vector<1x2xf32> to vector<8x2xf32>
    %41 = arith.mulf %11, %40 : vector<8x2xf32>
    %42 = arith.addf %39, %41 : vector<8x2xf32>
    %43 = vector.broadcast %23 : vector<1x2xf32> to vector<8x2xf32>
    %44 = arith.mulf %15, %43 : vector<8x2xf32>
    %45 = arith.addf %42, %44 : vector<8x2xf32>
    %46 = arith.addf %36, %45 : vector<8x2xf32>
    %c64 = arith.constant 64 : index
    %c0_25 = arith.constant 0 : index
    %47 = vector.load %arg2[%c64, %c0_25] : memref<108x2xf32, #tpu.memory_space<vmem>>, vector<1x2xf32>
    %48 = vector.broadcast %47 : vector<1x2xf32> to vector<8x2xf32>
    %49 = arith.addf %46, %48 : vector<8x2xf32>
    %cst = arith.constant 0.000000e+00 : f32
    %50 = vector.broadcast %cst : f32 to vector<8x2xf32>
    %51 = arith.cmpf ogt, %49, %50 : vector<8x2xf32>
    %52 = math.exp %49 : vector<8x2xf32>
    %cst_26 = arith.constant 1.000000e+00 : f32
    %53 = vector.broadcast %cst_26 : f32 to vector<8x2xf32>
    %54 = arith.subf %52, %53 : vector<8x2xf32>
    %cst_27 = arith.constant 1.67326319 : f32
    %55 = vector.broadcast %cst_27 : f32 to vector<8x2xf32>
    %56 = arith.mulf %55, %54 : vector<8x2xf32>
    %57 = arith.select %51, %49, %56 : vector<8x2xi1>, vector<8x2xf32>
    %cst_28 = arith.constant 1.05070102 : f32
    %58 = vector.broadcast %cst_28 : f32 to vector<8x2xf32>
    %59 = arith.mulf %58, %57 : vector<8x2xf32>
    %c1_29 = arith.constant 1 : index
    %c0_30 = arith.constant 0 : index
    %60 = vector.load %arg2[%c1_29, %c0_30] : memref<108x2xf32, #tpu.memory_space<vmem>>, vector<1x2xf32>
    %c9 = arith.constant 9 : index
    %c0_31 = arith.constant 0 : index
    %61 = vector.load %arg2[%c9, %c0_31] : memref<108x2xf32, #tpu.memory_space<vmem>>, vector<1x2xf32>
    %c17 = arith.constant 17 : index
    %c0_32 = arith.constant 0 : index
    %62 = vector.load %arg2[%c17, %c0_32] : memref<108x2xf32, #tpu.memory_space<vmem>>, vector<1x2xf32>
    %c25 = arith.constant 25 : index
    %c0_33 = arith.constant 0 : index
    %63 = vector.load %arg2[%c25, %c0_33] : memref<108x2xf32, #tpu.memory_space<vmem>>, vector<1x2xf32>
    %c33 = arith.constant 33 : index
    %c0_34 = arith.constant 0 : index
    %64 = vector.load %arg2[%c33, %c0_34] : memref<108x2xf32, #tpu.memory_space<vmem>>, vector<1x2xf32>
    %c41 = arith.constant 41 : index
    %c0_35 = arith.constant 0 : index
    %65 = vector.load %arg2[%c41, %c0_35] : memref<108x2xf32, #tpu.memory_space<vmem>>, vector<1x2xf32>
    %c49 = arith.constant 49 : index
    %c0_36 = arith.constant 0 : index
    %66 = vector.load %arg2[%c49, %c0_36] : memref<108x2xf32, #tpu.memory_space<vmem>>, vector<1x2xf32>
    %c57 = arith.constant 57 : index
    %c0_37 = arith.constant 0 : index
    %67 = vector.load %arg2[%c57, %c0_37] : memref<108x2xf32, #tpu.memory_space<vmem>>, vector<1x2xf32>
    %68 = vector.broadcast %60 : vector<1x2xf32> to vector<8x2xf32>
    %69 = arith.mulf %1, %68 : vector<8x2xf32>
    %70 = vector.broadcast %61 : vector<1x2xf32> to vector<8x2xf32>
    %71 = arith.mulf %3, %70 : vector<8x2xf32>
    %72 = vector.broadcast %62 : vector<1x2xf32> to vector<8x2xf32>
    %73 = arith.mulf %5, %72 : vector<8x2xf32>
    %74 = arith.addf %69, %73 : vector<8x2xf32>
    %75 = vector.broadcast %64 : vector<1x2xf32> to vector<8x2xf32>
    %76 = arith.mulf %9, %75 : vector<8x2xf32>
    %77 = arith.addf %74, %76 : vector<8x2xf32>
    %78 = vector.broadcast %66 : vector<1x2xf32> to vector<8x2xf32>
    %79 = arith.mulf %13, %78 : vector<8x2xf32>
    %80 = arith.addf %77, %79 : vector<8x2xf32>
    %81 = vector.broadcast %63 : vector<1x2xf32> to vector<8x2xf32>
    %82 = arith.mulf %7, %81 : vector<8x2xf32>
    %83 = arith.addf %71, %82 : vector<8x2xf32>
    %84 = vector.broadcast %65 : vector<1x2xf32> to vector<8x2xf32>
    %85 = arith.mulf %11, %84 : vector<8x2xf32>
    %86 = arith.addf %83, %85 : vector<8x2xf32>
    %87 = vector.broadcast %67 : vector<1x2xf32> to vector<8x2xf32>
    %88 = arith.mulf %15, %87 : vector<8x2xf32>
    %89 = arith.addf %86, %88 : vector<8x2xf32>
    %90 = arith.addf %80, %89 : vector<8x2xf32>
    %c65 = arith.constant 65 : index
    %c0_38 = arith.constant 0 : index
    %91 = vector.load %arg2[%c65, %c0_38] : memref<108x2xf32, #tpu.memory_space<vmem>>, vector<1x2xf32>
    %92 = vector.broadcast %91 : vector<1x2xf32> to vector<8x2xf32>
    %93 = arith.addf %90, %92 : vector<8x2xf32>
    %cst_39 = arith.constant 0.000000e+00 : f32
    %94 = vector.broadcast %cst_39 : f32 to vector<8x2xf32>
    %95 = arith.cmpf ogt, %93, %94 : vector<8x2xf32>
    %96 = math.exp %93 : vector<8x2xf32>
    %cst_40 = arith.constant 1.000000e+00 : f32
    %97 = vector.broadcast %cst_40 : f32 to vector<8x2xf32>
    %98 = arith.subf %96, %97 : vector<8x2xf32>
    %cst_41 = arith.constant 1.67326319 : f32
    %99 = vector.broadcast %cst_41 : f32 to vector<8x2xf32>
    %100 = arith.mulf %99, %98 : vector<8x2xf32>
    %101 = arith.select %95, %93, %100 : vector<8x2xi1>, vector<8x2xf32>
    %cst_42 = arith.constant 1.05070102 : f32
    %102 = vector.broadcast %cst_42 : f32 to vector<8x2xf32>
    %103 = arith.mulf %102, %101 : vector<8x2xf32>
    %c2_43 = arith.constant 2 : index
    %c0_44 = arith.constant 0 : index
    %104 = vector.load %arg2[%c2_43, %c0_44] : memref<108x2xf32, #tpu.memory_space<vmem>>, vector<1x2xf32>
    %c10 = arith.constant 10 : index
    %c0_45 = arith.constant 0 : index
    %105 = vector.load %arg2[%c10, %c0_45] : memref<108x2xf32, #tpu.memory_space<vmem>>, vector<1x2xf32>
    %c18 = arith.constant 18 : index
    %c0_46 = arith.constant 0 : index
    %106 = vector.load %arg2[%c18, %c0_46] : memref<108x2xf32, #tpu.memory_space<vmem>>, vector<1x2xf32>
    %c26 = arith.constant 26 : index
    %c0_47 = arith.constant 0 : index
    %107 = vector.load %arg2[%c26, %c0_47] : memref<108x2xf32, #tpu.memory_space<vmem>>, vector<1x2xf32>
    %c34 = arith.constant 34 : index
    %c0_48 = arith.constant 0 : index
    %108 = vector.load %arg2[%c34, %c0_48] : memref<108x2xf32, #tpu.memory_space<vmem>>, vector<1x2xf32>
    %c42 = arith.constant 42 : index
    %c0_49 = arith.constant 0 : index
    %109 = vector.load %arg2[%c42, %c0_49] : memref<108x2xf32, #tpu.memory_space<vmem>>, vector<1x2xf32>
    %c50 = arith.constant 50 : index
    %c0_50 = arith.constant 0 : index
    %110 = vector.load %arg2[%c50, %c0_50] : memref<108x2xf32, #tpu.memory_space<vmem>>, vector<1x2xf32>
    %c58 = arith.constant 58 : index
    %c0_51 = arith.constant 0 : index
    %111 = vector.load %arg2[%c58, %c0_51] : memref<108x2xf32, #tpu.memory_space<vmem>>, vector<1x2xf32>
    %112 = vector.broadcast %104 : vector<1x2xf32> to vector<8x2xf32>
    %113 = arith.mulf %1, %112 : vector<8x2xf32>
    %114 = vector.broadcast %105 : vector<1x2xf32> to vector<8x2xf32>
    %115 = arith.mulf %3, %114 : vector<8x2xf32>
    %116 = vector.broadcast %106 : vector<1x2xf32> to vector<8x2xf32>
    %117 = arith.mulf %5, %116 : vector<8x2xf32>
    %118 = arith.addf %113, %117 : vector<8x2xf32>
    %119 = vector.broadcast %108 : vector<1x2xf32> to vector<8x2xf32>
    %120 = arith.mulf %9, %119 : vector<8x2xf32>
    %121 = arith.addf %118, %120 : vector<8x2xf32>
    %122 = vector.broadcast %110 : vector<1x2xf32> to vector<8x2xf32>
    %123 = arith.mulf %13, %122 : vector<8x2xf32>
    %124 = arith.addf %121, %123 : vector<8x2xf32>
    %125 = vector.broadcast %107 : vector<1x2xf32> to vector<8x2xf32>
    %126 = arith.mulf %7, %125 : vector<8x2xf32>
    %127 = arith.addf %115, %126 : vector<8x2xf32>
    %128 = vector.broadcast %109 : vector<1x2xf32> to vector<8x2xf32>
    %129 = arith.mulf %11, %128 : vector<8x2xf32>
    %130 = arith.addf %127, %129 : vector<8x2xf32>
    %131 = vector.broadcast %111 : vector<1x2xf32> to vector<8x2xf32>
    %132 = arith.mulf %15, %131 : vector<8x2xf32>
    %133 = arith.addf %130, %132 : vector<8x2xf32>
    %134 = arith.addf %124, %133 : vector<8x2xf32>
    %c66 = arith.constant 66 : index
    %c0_52 = arith.constant 0 : index
    %135 = vector.load %arg2[%c66, %c0_52] : memref<108x2xf32, #tpu.memory_space<vmem>>, vector<1x2xf32>
    %136 = vector.broadcast %135 : vector<1x2xf32> to vector<8x2xf32>
    %137 = arith.addf %134, %136 : vector<8x2xf32>
    %cst_53 = arith.constant 0.000000e+00 : f32
    %138 = vector.broadcast %cst_53 : f32 to vector<8x2xf32>
    %139 = arith.cmpf ogt, %137, %138 : vector<8x2xf32>
    %140 = math.exp %137 : vector<8x2xf32>
    %cst_54 = arith.constant 1.000000e+00 : f32
    %141 = vector.broadcast %cst_54 : f32 to vector<8x2xf32>
    %142 = arith.subf %140, %141 : vector<8x2xf32>
    %cst_55 = arith.constant 1.67326319 : f32
    %143 = vector.broadcast %cst_55 : f32 to vector<8x2xf32>
    %144 = arith.mulf %143, %142 : vector<8x2xf32>
    %145 = arith.select %139, %137, %144 : vector<8x2xi1>, vector<8x2xf32>
    %cst_56 = arith.constant 1.05070102 : f32
    %146 = vector.broadcast %cst_56 : f32 to vector<8x2xf32>
    %147 = arith.mulf %146, %145 : vector<8x2xf32>
    %c3_57 = arith.constant 3 : index
    %c0_58 = arith.constant 0 : index
    %148 = vector.load %arg2[%c3_57, %c0_58] : memref<108x2xf32, #tpu.memory_space<vmem>>, vector<1x2xf32>
    %c11 = arith.constant 11 : index
    %c0_59 = arith.constant 0 : index
    %149 = vector.load %arg2[%c11, %c0_59] : memref<108x2xf32, #tpu.memory_space<vmem>>, vector<1x2xf32>
    %c19 = arith.constant 19 : index
    %c0_60 = arith.constant 0 : index
    %150 = vector.load %arg2[%c19, %c0_60] : memref<108x2xf32, #tpu.memory_space<vmem>>, vector<1x2xf32>
    %c27 = arith.constant 27 : index
    %c0_61 = arith.constant 0 : index
    %151 = vector.load %arg2[%c27, %c0_61] : memref<108x2xf32, #tpu.memory_space<vmem>>, vector<1x2xf32>
    %c35 = arith.constant 35 : index
    %c0_62 = arith.constant 0 : index
    %152 = vector.load %arg2[%c35, %c0_62] : memref<108x2xf32, #tpu.memory_space<vmem>>, vector<1x2xf32>
    %c43 = arith.constant 43 : index
    %c0_63 = arith.constant 0 : index
    %153 = vector.load %arg2[%c43, %c0_63] : memref<108x2xf32, #tpu.memory_space<vmem>>, vector<1x2xf32>
    %c51 = arith.constant 51 : index
    %c0_64 = arith.constant 0 : index
    %154 = vector.load %arg2[%c51, %c0_64] : memref<108x2xf32, #tpu.memory_space<vmem>>, vector<1x2xf32>
    %c59 = arith.constant 59 : index
    %c0_65 = arith.constant 0 : index
    %155 = vector.load %arg2[%c59, %c0_65] : memref<108x2xf32, #tpu.memory_space<vmem>>, vector<1x2xf32>
    %156 = vector.broadcast %148 : vector<1x2xf32> to vector<8x2xf32>
    %157 = arith.mulf %1, %156 : vector<8x2xf32>
    %158 = vector.broadcast %149 : vector<1x2xf32> to vector<8x2xf32>
    %159 = arith.mulf %3, %158 : vector<8x2xf32>
    %160 = vector.broadcast %150 : vector<1x2xf32> to vector<8x2xf32>
    %161 = arith.mulf %5, %160 : vector<8x2xf32>
    %162 = arith.addf %157, %161 : vector<8x2xf32>
    %163 = vector.broadcast %152 : vector<1x2xf32> to vector<8x2xf32>
    %164 = arith.mulf %9, %163 : vector<8x2xf32>
    %165 = arith.addf %162, %164 : vector<8x2xf32>
    %166 = vector.broadcast %154 : vector<1x2xf32> to vector<8x2xf32>
    %167 = arith.mulf %13, %166 : vector<8x2xf32>
    %168 = arith.addf %165, %167 : vector<8x2xf32>
    %169 = vector.broadcast %151 : vector<1x2xf32> to vector<8x2xf32>
    %170 = arith.mulf %7, %169 : vector<8x2xf32>
    %171 = arith.addf %159, %170 : vector<8x2xf32>
    %172 = vector.broadcast %153 : vector<1x2xf32> to vector<8x2xf32>
    %173 = arith.mulf %11, %172 : vector<8x2xf32>
    %174 = arith.addf %171, %173 : vector<8x2xf32>
    %175 = vector.broadcast %155 : vector<1x2xf32> to vector<8x2xf32>
    %176 = arith.mulf %15, %175 : vector<8x2xf32>
    %177 = arith.addf %174, %176 : vector<8x2xf32>
    %178 = arith.addf %168, %177 : vector<8x2xf32>
    %c67 = arith.constant 67 : index
    %c0_66 = arith.constant 0 : index
    %179 = vector.load %arg2[%c67, %c0_66] : memref<108x2xf32, #tpu.memory_space<vmem>>, vector<1x2xf32>
    %180 = vector.broadcast %179 : vector<1x2xf32> to vector<8x2xf32>
    %181 = arith.addf %178, %180 : vector<8x2xf32>
    %cst_67 = arith.constant 0.000000e+00 : f32
    %182 = vector.broadcast %cst_67 : f32 to vector<8x2xf32>
    %183 = arith.cmpf ogt, %181, %182 : vector<8x2xf32>
    %184 = math.exp %181 : vector<8x2xf32>
    %cst_68 = arith.constant 1.000000e+00 : f32
    %185 = vector.broadcast %cst_68 : f32 to vector<8x2xf32>
    %186 = arith.subf %184, %185 : vector<8x2xf32>
    %cst_69 = arith.constant 1.67326319 : f32
    %187 = vector.broadcast %cst_69 : f32 to vector<8x2xf32>
    %188 = arith.mulf %187, %186 : vector<8x2xf32>
    %189 = arith.select %183, %181, %188 : vector<8x2xi1>, vector<8x2xf32>
    %cst_70 = arith.constant 1.05070102 : f32
    %190 = vector.broadcast %cst_70 : f32 to vector<8x2xf32>
    %191 = arith.mulf %190, %189 : vector<8x2xf32>
    %c4_71 = arith.constant 4 : index
    %c0_72 = arith.constant 0 : index
    %192 = vector.load %arg2[%c4_71, %c0_72] : memref<108x2xf32, #tpu.memory_space<vmem>>, vector<1x2xf32>
    %c12 = arith.constant 12 : index
    %c0_73 = arith.constant 0 : index
    %193 = vector.load %arg2[%c12, %c0_73] : memref<108x2xf32, #tpu.memory_space<vmem>>, vector<1x2xf32>
    %c20 = arith.constant 20 : index
    %c0_74 = arith.constant 0 : index
    %194 = vector.load %arg2[%c20, %c0_74] : memref<108x2xf32, #tpu.memory_space<vmem>>, vector<1x2xf32>
    %c28 = arith.constant 28 : index
    %c0_75 = arith.constant 0 : index
    %195 = vector.load %arg2[%c28, %c0_75] : memref<108x2xf32, #tpu.memory_space<vmem>>, vector<1x2xf32>
    %c36 = arith.constant 36 : index
    %c0_76 = arith.constant 0 : index
    %196 = vector.load %arg2[%c36, %c0_76] : memref<108x2xf32, #tpu.memory_space<vmem>>, vector<1x2xf32>
    %c44 = arith.constant 44 : index
    %c0_77 = arith.constant 0 : index
    %197 = vector.load %arg2[%c44, %c0_77] : memref<108x2xf32, #tpu.memory_space<vmem>>, vector<1x2xf32>
    %c52 = arith.constant 52 : index
    %c0_78 = arith.constant 0 : index
    %198 = vector.load %arg2[%c52, %c0_78] : memref<108x2xf32, #tpu.memory_space<vmem>>, vector<1x2xf32>
    %c60 = arith.constant 60 : index
    %c0_79 = arith.constant 0 : index
    %199 = vector.load %arg2[%c60, %c0_79] : memref<108x2xf32, #tpu.memory_space<vmem>>, vector<1x2xf32>
    %200 = vector.broadcast %192 : vector<1x2xf32> to vector<8x2xf32>
    %201 = arith.mulf %1, %200 : vector<8x2xf32>
    %202 = vector.broadcast %193 : vector<1x2xf32> to vector<8x2xf32>
    %203 = arith.mulf %3, %202 : vector<8x2xf32>
    %204 = vector.broadcast %194 : vector<1x2xf32> to vector<8x2xf32>
    %205 = arith.mulf %5, %204 : vector<8x2xf32>
    %206 = arith.addf %201, %205 : vector<8x2xf32>
    %207 = vector.broadcast %196 : vector<1x2xf32> to vector<8x2xf32>
    %208 = arith.mulf %9, %207 : vector<8x2xf32>
    %209 = arith.addf %206, %208 : vector<8x2xf32>
    %210 = vector.broadcast %198 : vector<1x2xf32> to vector<8x2xf32>
    %211 = arith.mulf %13, %210 : vector<8x2xf32>
    %212 = arith.addf %209, %211 : vector<8x2xf32>
    %213 = vector.broadcast %195 : vector<1x2xf32> to vector<8x2xf32>
    %214 = arith.mulf %7, %213 : vector<8x2xf32>
    %215 = arith.addf %203, %214 : vector<8x2xf32>
    %216 = vector.broadcast %197 : vector<1x2xf32> to vector<8x2xf32>
    %217 = arith.mulf %11, %216 : vector<8x2xf32>
    %218 = arith.addf %215, %217 : vector<8x2xf32>
    %219 = vector.broadcast %199 : vector<1x2xf32> to vector<8x2xf32>
    %220 = arith.mulf %15, %219 : vector<8x2xf32>
    %221 = arith.addf %218, %220 : vector<8x2xf32>
    %222 = arith.addf %212, %221 : vector<8x2xf32>
    %c68 = arith.constant 68 : index
    %c0_80 = arith.constant 0 : index
    %223 = vector.load %arg2[%c68, %c0_80] : memref<108x2xf32, #tpu.memory_space<vmem>>, vector<1x2xf32>
    %224 = vector.broadcast %223 : vector<1x2xf32> to vector<8x2xf32>
    %225 = arith.addf %222, %224 : vector<8x2xf32>
    %cst_81 = arith.constant 0.000000e+00 : f32
    %226 = vector.broadcast %cst_81 : f32 to vector<8x2xf32>
    %227 = arith.cmpf ogt, %225, %226 : vector<8x2xf32>
    %228 = math.exp %225 : vector<8x2xf32>
    %cst_82 = arith.constant 1.000000e+00 : f32
    %229 = vector.broadcast %cst_82 : f32 to vector<8x2xf32>
    %230 = arith.subf %228, %229 : vector<8x2xf32>
    %cst_83 = arith.constant 1.67326319 : f32
    %231 = vector.broadcast %cst_83 : f32 to vector<8x2xf32>
    %232 = arith.mulf %231, %230 : vector<8x2xf32>
    %233 = arith.select %227, %225, %232 : vector<8x2xi1>, vector<8x2xf32>
    %cst_84 = arith.constant 1.05070102 : f32
    %234 = vector.broadcast %cst_84 : f32 to vector<8x2xf32>
    %235 = arith.mulf %234, %233 : vector<8x2xf32>
    %c5_85 = arith.constant 5 : index
    %c0_86 = arith.constant 0 : index
    %236 = vector.load %arg2[%c5_85, %c0_86] : memref<108x2xf32, #tpu.memory_space<vmem>>, vector<1x2xf32>
    %c13 = arith.constant 13 : index
    %c0_87 = arith.constant 0 : index
    %237 = vector.load %arg2[%c13, %c0_87] : memref<108x2xf32, #tpu.memory_space<vmem>>, vector<1x2xf32>
    %c21 = arith.constant 21 : index
    %c0_88 = arith.constant 0 : index
    %238 = vector.load %arg2[%c21, %c0_88] : memref<108x2xf32, #tpu.memory_space<vmem>>, vector<1x2xf32>
    %c29 = arith.constant 29 : index
    %c0_89 = arith.constant 0 : index
    %239 = vector.load %arg2[%c29, %c0_89] : memref<108x2xf32, #tpu.memory_space<vmem>>, vector<1x2xf32>
    %c37 = arith.constant 37 : index
    %c0_90 = arith.constant 0 : index
    %240 = vector.load %arg2[%c37, %c0_90] : memref<108x2xf32, #tpu.memory_space<vmem>>, vector<1x2xf32>
    %c45 = arith.constant 45 : index
    %c0_91 = arith.constant 0 : index
    %241 = vector.load %arg2[%c45, %c0_91] : memref<108x2xf32, #tpu.memory_space<vmem>>, vector<1x2xf32>
    %c53 = arith.constant 53 : index
    %c0_92 = arith.constant 0 : index
    %242 = vector.load %arg2[%c53, %c0_92] : memref<108x2xf32, #tpu.memory_space<vmem>>, vector<1x2xf32>
    %c61 = arith.constant 61 : index
    %c0_93 = arith.constant 0 : index
    %243 = vector.load %arg2[%c61, %c0_93] : memref<108x2xf32, #tpu.memory_space<vmem>>, vector<1x2xf32>
    %244 = vector.broadcast %236 : vector<1x2xf32> to vector<8x2xf32>
    %245 = arith.mulf %1, %244 : vector<8x2xf32>
    %246 = vector.broadcast %237 : vector<1x2xf32> to vector<8x2xf32>
    %247 = arith.mulf %3, %246 : vector<8x2xf32>
    %248 = vector.broadcast %238 : vector<1x2xf32> to vector<8x2xf32>
    %249 = arith.mulf %5, %248 : vector<8x2xf32>
    %250 = arith.addf %245, %249 : vector<8x2xf32>
    %251 = vector.broadcast %240 : vector<1x2xf32> to vector<8x2xf32>
    %252 = arith.mulf %9, %251 : vector<8x2xf32>
    %253 = arith.addf %250, %252 : vector<8x2xf32>
    %254 = vector.broadcast %242 : vector<1x2xf32> to vector<8x2xf32>
    %255 = arith.mulf %13, %254 : vector<8x2xf32>
    %256 = arith.addf %253, %255 : vector<8x2xf32>
    %257 = vector.broadcast %239 : vector<1x2xf32> to vector<8x2xf32>
    %258 = arith.mulf %7, %257 : vector<8x2xf32>
    %259 = arith.addf %247, %258 : vector<8x2xf32>
    %260 = vector.broadcast %241 : vector<1x2xf32> to vector<8x2xf32>
    %261 = arith.mulf %11, %260 : vector<8x2xf32>
    %262 = arith.addf %259, %261 : vector<8x2xf32>
    %263 = vector.broadcast %243 : vector<1x2xf32> to vector<8x2xf32>
    %264 = arith.mulf %15, %263 : vector<8x2xf32>
    %265 = arith.addf %262, %264 : vector<8x2xf32>
    %266 = arith.addf %256, %265 : vector<8x2xf32>
    %c69 = arith.constant 69 : index
    %c0_94 = arith.constant 0 : index
    %267 = vector.load %arg2[%c69, %c0_94] : memref<108x2xf32, #tpu.memory_space<vmem>>, vector<1x2xf32>
    %268 = vector.broadcast %267 : vector<1x2xf32> to vector<8x2xf32>
    %269 = arith.addf %266, %268 : vector<8x2xf32>
    %cst_95 = arith.constant 0.000000e+00 : f32
    %270 = vector.broadcast %cst_95 : f32 to vector<8x2xf32>
    %271 = arith.cmpf ogt, %269, %270 : vector<8x2xf32>
    %272 = math.exp %269 : vector<8x2xf32>
    %cst_96 = arith.constant 1.000000e+00 : f32
    %273 = vector.broadcast %cst_96 : f32 to vector<8x2xf32>
    %274 = arith.subf %272, %273 : vector<8x2xf32>
    %cst_97 = arith.constant 1.67326319 : f32
    %275 = vector.broadcast %cst_97 : f32 to vector<8x2xf32>
    %276 = arith.mulf %275, %274 : vector<8x2xf32>
    %277 = arith.select %271, %269, %276 : vector<8x2xi1>, vector<8x2xf32>
    %cst_98 = arith.constant 1.05070102 : f32
    %278 = vector.broadcast %cst_98 : f32 to vector<8x2xf32>
    %279 = arith.mulf %278, %277 : vector<8x2xf32>
    %c6_99 = arith.constant 6 : index
    %c0_100 = arith.constant 0 : index
    %280 = vector.load %arg2[%c6_99, %c0_100] : memref<108x2xf32, #tpu.memory_space<vmem>>, vector<1x2xf32>
    %c14 = arith.constant 14 : index
    %c0_101 = arith.constant 0 : index
    %281 = vector.load %arg2[%c14, %c0_101] : memref<108x2xf32, #tpu.memory_space<vmem>>, vector<1x2xf32>
    %c22 = arith.constant 22 : index
    %c0_102 = arith.constant 0 : index
    %282 = vector.load %arg2[%c22, %c0_102] : memref<108x2xf32, #tpu.memory_space<vmem>>, vector<1x2xf32>
    %c30 = arith.constant 30 : index
    %c0_103 = arith.constant 0 : index
    %283 = vector.load %arg2[%c30, %c0_103] : memref<108x2xf32, #tpu.memory_space<vmem>>, vector<1x2xf32>
    %c38 = arith.constant 38 : index
    %c0_104 = arith.constant 0 : index
    %284 = vector.load %arg2[%c38, %c0_104] : memref<108x2xf32, #tpu.memory_space<vmem>>, vector<1x2xf32>
    %c46 = arith.constant 46 : index
    %c0_105 = arith.constant 0 : index
    %285 = vector.load %arg2[%c46, %c0_105] : memref<108x2xf32, #tpu.memory_space<vmem>>, vector<1x2xf32>
    %c54 = arith.constant 54 : index
    %c0_106 = arith.constant 0 : index
    %286 = vector.load %arg2[%c54, %c0_106] : memref<108x2xf32, #tpu.memory_space<vmem>>, vector<1x2xf32>
    %c62 = arith.constant 62 : index
    %c0_107 = arith.constant 0 : index
    %287 = vector.load %arg2[%c62, %c0_107] : memref<108x2xf32, #tpu.memory_space<vmem>>, vector<1x2xf32>
    %288 = vector.broadcast %280 : vector<1x2xf32> to vector<8x2xf32>
    %289 = arith.mulf %1, %288 : vector<8x2xf32>
    %290 = vector.broadcast %281 : vector<1x2xf32> to vector<8x2xf32>
    %291 = arith.mulf %3, %290 : vector<8x2xf32>
    %292 = vector.broadcast %282 : vector<1x2xf32> to vector<8x2xf32>
    %293 = arith.mulf %5, %292 : vector<8x2xf32>
    %294 = arith.addf %289, %293 : vector<8x2xf32>
    %295 = vector.broadcast %284 : vector<1x2xf32> to vector<8x2xf32>
    %296 = arith.mulf %9, %295 : vector<8x2xf32>
    %297 = arith.addf %294, %296 : vector<8x2xf32>
    %298 = vector.broadcast %286 : vector<1x2xf32> to vector<8x2xf32>
    %299 = arith.mulf %13, %298 : vector<8x2xf32>
    %300 = arith.addf %297, %299 : vector<8x2xf32>
    %301 = vector.broadcast %283 : vector<1x2xf32> to vector<8x2xf32>
    %302 = arith.mulf %7, %301 : vector<8x2xf32>
    %303 = arith.addf %291, %302 : vector<8x2xf32>
    %304 = vector.broadcast %285 : vector<1x2xf32> to vector<8x2xf32>
    %305 = arith.mulf %11, %304 : vector<8x2xf32>
    %306 = arith.addf %303, %305 : vector<8x2xf32>
    %307 = vector.broadcast %287 : vector<1x2xf32> to vector<8x2xf32>
    %308 = arith.mulf %15, %307 : vector<8x2xf32>
    %309 = arith.addf %306, %308 : vector<8x2xf32>
    %310 = arith.addf %300, %309 : vector<8x2xf32>
    %c70 = arith.constant 70 : index
    %c0_108 = arith.constant 0 : index
    %311 = vector.load %arg2[%c70, %c0_108] : memref<108x2xf32, #tpu.memory_space<vmem>>, vector<1x2xf32>
    %312 = vector.broadcast %311 : vector<1x2xf32> to vector<8x2xf32>
    %313 = arith.addf %310, %312 : vector<8x2xf32>
    %cst_109 = arith.constant 0.000000e+00 : f32
    %314 = vector.broadcast %cst_109 : f32 to vector<8x2xf32>
    %315 = arith.cmpf ogt, %313, %314 : vector<8x2xf32>
    %316 = math.exp %313 : vector<8x2xf32>
    %cst_110 = arith.constant 1.000000e+00 : f32
    %317 = vector.broadcast %cst_110 : f32 to vector<8x2xf32>
    %318 = arith.subf %316, %317 : vector<8x2xf32>
    %cst_111 = arith.constant 1.67326319 : f32
    %319 = vector.broadcast %cst_111 : f32 to vector<8x2xf32>
    %320 = arith.mulf %319, %318 : vector<8x2xf32>
    %321 = arith.select %315, %313, %320 : vector<8x2xi1>, vector<8x2xf32>
    %cst_112 = arith.constant 1.05070102 : f32
    %322 = vector.broadcast %cst_112 : f32 to vector<8x2xf32>
    %323 = arith.mulf %322, %321 : vector<8x2xf32>
    %c7_113 = arith.constant 7 : index
    %c0_114 = arith.constant 0 : index
    %324 = vector.load %arg2[%c7_113, %c0_114] : memref<108x2xf32, #tpu.memory_space<vmem>>, vector<1x2xf32>
    %c15 = arith.constant 15 : index
    %c0_115 = arith.constant 0 : index
    %325 = vector.load %arg2[%c15, %c0_115] : memref<108x2xf32, #tpu.memory_space<vmem>>, vector<1x2xf32>
    %c23 = arith.constant 23 : index
    %c0_116 = arith.constant 0 : index
    %326 = vector.load %arg2[%c23, %c0_116] : memref<108x2xf32, #tpu.memory_space<vmem>>, vector<1x2xf32>
    %c31 = arith.constant 31 : index
    %c0_117 = arith.constant 0 : index
    %327 = vector.load %arg2[%c31, %c0_117] : memref<108x2xf32, #tpu.memory_space<vmem>>, vector<1x2xf32>
    %c39 = arith.constant 39 : index
    %c0_118 = arith.constant 0 : index
    %328 = vector.load %arg2[%c39, %c0_118] : memref<108x2xf32, #tpu.memory_space<vmem>>, vector<1x2xf32>
    %c47 = arith.constant 47 : index
    %c0_119 = arith.constant 0 : index
    %329 = vector.load %arg2[%c47, %c0_119] : memref<108x2xf32, #tpu.memory_space<vmem>>, vector<1x2xf32>
    %c55 = arith.constant 55 : index
    %c0_120 = arith.constant 0 : index
    %330 = vector.load %arg2[%c55, %c0_120] : memref<108x2xf32, #tpu.memory_space<vmem>>, vector<1x2xf32>
    %c63 = arith.constant 63 : index
    %c0_121 = arith.constant 0 : index
    %331 = vector.load %arg2[%c63, %c0_121] : memref<108x2xf32, #tpu.memory_space<vmem>>, vector<1x2xf32>
    %332 = vector.broadcast %324 : vector<1x2xf32> to vector<8x2xf32>
    %333 = arith.mulf %1, %332 : vector<8x2xf32>
    %334 = vector.broadcast %325 : vector<1x2xf32> to vector<8x2xf32>
    %335 = arith.mulf %3, %334 : vector<8x2xf32>
    %336 = vector.broadcast %326 : vector<1x2xf32> to vector<8x2xf32>
    %337 = arith.mulf %5, %336 : vector<8x2xf32>
    %338 = arith.addf %333, %337 : vector<8x2xf32>
    %339 = vector.broadcast %328 : vector<1x2xf32> to vector<8x2xf32>
    %340 = arith.mulf %9, %339 : vector<8x2xf32>
    %341 = arith.addf %338, %340 : vector<8x2xf32>
    %342 = vector.broadcast %330 : vector<1x2xf32> to vector<8x2xf32>
    %343 = arith.mulf %13, %342 : vector<8x2xf32>
    %344 = arith.addf %341, %343 : vector<8x2xf32>
    %345 = vector.broadcast %327 : vector<1x2xf32> to vector<8x2xf32>
    %346 = arith.mulf %7, %345 : vector<8x2xf32>
    %347 = arith.addf %335, %346 : vector<8x2xf32>
    %348 = vector.broadcast %329 : vector<1x2xf32> to vector<8x2xf32>
    %349 = arith.mulf %11, %348 : vector<8x2xf32>
    %350 = arith.addf %347, %349 : vector<8x2xf32>
    %351 = vector.broadcast %331 : vector<1x2xf32> to vector<8x2xf32>
    %352 = arith.mulf %15, %351 : vector<8x2xf32>
    %353 = arith.addf %350, %352 : vector<8x2xf32>
    %354 = arith.addf %344, %353 : vector<8x2xf32>
    %c71 = arith.constant 71 : index
    %c0_122 = arith.constant 0 : index
    %355 = vector.load %arg2[%c71, %c0_122] : memref<108x2xf32, #tpu.memory_space<vmem>>, vector<1x2xf32>
    %356 = vector.broadcast %355 : vector<1x2xf32> to vector<8x2xf32>
    %357 = arith.addf %354, %356 : vector<8x2xf32>
    %cst_123 = arith.constant 0.000000e+00 : f32
    %358 = vector.broadcast %cst_123 : f32 to vector<8x2xf32>
    %359 = arith.cmpf ogt, %357, %358 : vector<8x2xf32>
    %360 = math.exp %357 : vector<8x2xf32>
    %cst_124 = arith.constant 1.000000e+00 : f32
    %361 = vector.broadcast %cst_124 : f32 to vector<8x2xf32>
    %362 = arith.subf %360, %361 : vector<8x2xf32>
    %cst_125 = arith.constant 1.67326319 : f32
    %363 = vector.broadcast %cst_125 : f32 to vector<8x2xf32>
    %364 = arith.mulf %363, %362 : vector<8x2xf32>
    %365 = arith.select %359, %357, %364 : vector<8x2xi1>, vector<8x2xf32>
    %cst_126 = arith.constant 1.05070102 : f32
    %366 = vector.broadcast %cst_126 : f32 to vector<8x2xf32>
    %367 = arith.mulf %366, %365 : vector<8x2xf32>
    %c72 = arith.constant 72 : index
    %c0_127 = arith.constant 0 : index
    %368 = vector.load %arg2[%c72, %c0_127] : memref<108x2xf32, #tpu.memory_space<vmem>>, vector<1x2xf32>
    %c76 = arith.constant 76 : index
    %c0_128 = arith.constant 0 : index
    %369 = vector.load %arg2[%c76, %c0_128] : memref<108x2xf32, #tpu.memory_space<vmem>>, vector<1x2xf32>
    %c80 = arith.constant 80 : index
    %c0_129 = arith.constant 0 : index
    %370 = vector.load %arg2[%c80, %c0_129] : memref<108x2xf32, #tpu.memory_space<vmem>>, vector<1x2xf32>
    %c84 = arith.constant 84 : index
    %c0_130 = arith.constant 0 : index
    %371 = vector.load %arg2[%c84, %c0_130] : memref<108x2xf32, #tpu.memory_space<vmem>>, vector<1x2xf32>
    %c88 = arith.constant 88 : index
    %c0_131 = arith.constant 0 : index
    %372 = vector.load %arg2[%c88, %c0_131] : memref<108x2xf32, #tpu.memory_space<vmem>>, vector<1x2xf32>
    %c92 = arith.constant 92 : index
    %c0_132 = arith.constant 0 : index
    %373 = vector.load %arg2[%c92, %c0_132] : memref<108x2xf32, #tpu.memory_space<vmem>>, vector<1x2xf32>
    %c96 = arith.constant 96 : index
    %c0_133 = arith.constant 0 : index
    %374 = vector.load %arg2[%c96, %c0_133] : memref<108x2xf32, #tpu.memory_space<vmem>>, vector<1x2xf32>
    %c100 = arith.constant 100 : index
    %c0_134 = arith.constant 0 : index
    %375 = vector.load %arg2[%c100, %c0_134] : memref<108x2xf32, #tpu.memory_space<vmem>>, vector<1x2xf32>
    %376 = vector.broadcast %368 : vector<1x2xf32> to vector<8x2xf32>
    %377 = arith.mulf %59, %376 : vector<8x2xf32>
    %378 = vector.broadcast %369 : vector<1x2xf32> to vector<8x2xf32>
    %379 = arith.mulf %103, %378 : vector<8x2xf32>
    %380 = vector.broadcast %370 : vector<1x2xf32> to vector<8x2xf32>
    %381 = arith.mulf %147, %380 : vector<8x2xf32>
    %382 = arith.addf %377, %381 : vector<8x2xf32>
    %383 = vector.broadcast %372 : vector<1x2xf32> to vector<8x2xf32>
    %384 = arith.mulf %235, %383 : vector<8x2xf32>
    %385 = arith.addf %382, %384 : vector<8x2xf32>
    %386 = vector.broadcast %374 : vector<1x2xf32> to vector<8x2xf32>
    %387 = arith.mulf %323, %386 : vector<8x2xf32>
    %388 = arith.addf %385, %387 : vector<8x2xf32>
    %389 = vector.broadcast %371 : vector<1x2xf32> to vector<8x2xf32>
    %390 = arith.mulf %191, %389 : vector<8x2xf32>
    %391 = arith.addf %379, %390 : vector<8x2xf32>
    %392 = vector.broadcast %373 : vector<1x2xf32> to vector<8x2xf32>
    %393 = arith.mulf %279, %392 : vector<8x2xf32>
    %394 = arith.addf %391, %393 : vector<8x2xf32>
    %395 = vector.broadcast %375 : vector<1x2xf32> to vector<8x2xf32>
    %396 = arith.mulf %367, %395 : vector<8x2xf32>
    %397 = arith.addf %394, %396 : vector<8x2xf32>
    %398 = arith.addf %388, %397 : vector<8x2xf32>
    %c104 = arith.constant 104 : index
    %c0_135 = arith.constant 0 : index
    %399 = vector.load %arg2[%c104, %c0_135] : memref<108x2xf32, #tpu.memory_space<vmem>>, vector<1x2xf32>
    %400 = vector.broadcast %399 : vector<1x2xf32> to vector<8x2xf32>
    %401 = arith.addf %398, %400 : vector<8x2xf32>
    %c73 = arith.constant 73 : index
    %c0_136 = arith.constant 0 : index
    %402 = vector.load %arg2[%c73, %c0_136] : memref<108x2xf32, #tpu.memory_space<vmem>>, vector<1x2xf32>
    %c77 = arith.constant 77 : index
    %c0_137 = arith.constant 0 : index
    %403 = vector.load %arg2[%c77, %c0_137] : memref<108x2xf32, #tpu.memory_space<vmem>>, vector<1x2xf32>
    %c81 = arith.constant 81 : index
    %c0_138 = arith.constant 0 : index
    %404 = vector.load %arg2[%c81, %c0_138] : memref<108x2xf32, #tpu.memory_space<vmem>>, vector<1x2xf32>
    %c85 = arith.constant 85 : index
    %c0_139 = arith.constant 0 : index
    %405 = vector.load %arg2[%c85, %c0_139] : memref<108x2xf32, #tpu.memory_space<vmem>>, vector<1x2xf32>
    %c89 = arith.constant 89 : index
    %c0_140 = arith.constant 0 : index
    %406 = vector.load %arg2[%c89, %c0_140] : memref<108x2xf32, #tpu.memory_space<vmem>>, vector<1x2xf32>
    %c93 = arith.constant 93 : index
    %c0_141 = arith.constant 0 : index
    %407 = vector.load %arg2[%c93, %c0_141] : memref<108x2xf32, #tpu.memory_space<vmem>>, vector<1x2xf32>
    %c97 = arith.constant 97 : index
    %c0_142 = arith.constant 0 : index
    %408 = vector.load %arg2[%c97, %c0_142] : memref<108x2xf32, #tpu.memory_space<vmem>>, vector<1x2xf32>
    %c101 = arith.constant 101 : index
    %c0_143 = arith.constant 0 : index
    %409 = vector.load %arg2[%c101, %c0_143] : memref<108x2xf32, #tpu.memory_space<vmem>>, vector<1x2xf32>
    %410 = vector.broadcast %402 : vector<1x2xf32> to vector<8x2xf32>
    %411 = arith.mulf %59, %410 : vector<8x2xf32>
    %412 = vector.broadcast %403 : vector<1x2xf32> to vector<8x2xf32>
    %413 = arith.mulf %103, %412 : vector<8x2xf32>
    %414 = vector.broadcast %404 : vector<1x2xf32> to vector<8x2xf32>
    %415 = arith.mulf %147, %414 : vector<8x2xf32>
    %416 = arith.addf %411, %415 : vector<8x2xf32>
    %417 = vector.broadcast %406 : vector<1x2xf32> to vector<8x2xf32>
    %418 = arith.mulf %235, %417 : vector<8x2xf32>
    %419 = arith.addf %416, %418 : vector<8x2xf32>
    %420 = vector.broadcast %408 : vector<1x2xf32> to vector<8x2xf32>
    %421 = arith.mulf %323, %420 : vector<8x2xf32>
    %422 = arith.addf %419, %421 : vector<8x2xf32>
    %423 = vector.broadcast %405 : vector<1x2xf32> to vector<8x2xf32>
    %424 = arith.mulf %191, %423 : vector<8x2xf32>
    %425 = arith.addf %413, %424 : vector<8x2xf32>
    %426 = vector.broadcast %407 : vector<1x2xf32> to vector<8x2xf32>
    %427 = arith.mulf %279, %426 : vector<8x2xf32>
    %428 = arith.addf %425, %427 : vector<8x2xf32>
    %429 = vector.broadcast %409 : vector<1x2xf32> to vector<8x2xf32>
    %430 = arith.mulf %367, %429 : vector<8x2xf32>
    %431 = arith.addf %428, %430 : vector<8x2xf32>
    %432 = arith.addf %422, %431 : vector<8x2xf32>
    %c105 = arith.constant 105 : index
    %c0_144 = arith.constant 0 : index
    %433 = vector.load %arg2[%c105, %c0_144] : memref<108x2xf32, #tpu.memory_space<vmem>>, vector<1x2xf32>
    %434 = vector.broadcast %433 : vector<1x2xf32> to vector<8x2xf32>
    %435 = arith.addf %432, %434 : vector<8x2xf32>
    %c74 = arith.constant 74 : index
    %c0_145 = arith.constant 0 : index
    %436 = vector.load %arg2[%c74, %c0_145] : memref<108x2xf32, #tpu.memory_space<vmem>>, vector<1x2xf32>
    %c78 = arith.constant 78 : index
    %c0_146 = arith.constant 0 : index
    %437 = vector.load %arg2[%c78, %c0_146] : memref<108x2xf32, #tpu.memory_space<vmem>>, vector<1x2xf32>
    %c82 = arith.constant 82 : index
    %c0_147 = arith.constant 0 : index
    %438 = vector.load %arg2[%c82, %c0_147] : memref<108x2xf32, #tpu.memory_space<vmem>>, vector<1x2xf32>
    %c86 = arith.constant 86 : index
    %c0_148 = arith.constant 0 : index
    %439 = vector.load %arg2[%c86, %c0_148] : memref<108x2xf32, #tpu.memory_space<vmem>>, vector<1x2xf32>
    %c90 = arith.constant 90 : index
    %c0_149 = arith.constant 0 : index
    %440 = vector.load %arg2[%c90, %c0_149] : memref<108x2xf32, #tpu.memory_space<vmem>>, vector<1x2xf32>
    %c94 = arith.constant 94 : index
    %c0_150 = arith.constant 0 : index
    %441 = vector.load %arg2[%c94, %c0_150] : memref<108x2xf32, #tpu.memory_space<vmem>>, vector<1x2xf32>
    %c98 = arith.constant 98 : index
    %c0_151 = arith.constant 0 : index
    %442 = vector.load %arg2[%c98, %c0_151] : memref<108x2xf32, #tpu.memory_space<vmem>>, vector<1x2xf32>
    %c102 = arith.constant 102 : index
    %c0_152 = arith.constant 0 : index
    %443 = vector.load %arg2[%c102, %c0_152] : memref<108x2xf32, #tpu.memory_space<vmem>>, vector<1x2xf32>
    %444 = vector.broadcast %436 : vector<1x2xf32> to vector<8x2xf32>
    %445 = arith.mulf %59, %444 : vector<8x2xf32>
    %446 = vector.broadcast %437 : vector<1x2xf32> to vector<8x2xf32>
    %447 = arith.mulf %103, %446 : vector<8x2xf32>
    %448 = vector.broadcast %438 : vector<1x2xf32> to vector<8x2xf32>
    %449 = arith.mulf %147, %448 : vector<8x2xf32>
    %450 = arith.addf %445, %449 : vector<8x2xf32>
    %451 = vector.broadcast %440 : vector<1x2xf32> to vector<8x2xf32>
    %452 = arith.mulf %235, %451 : vector<8x2xf32>
    %453 = arith.addf %450, %452 : vector<8x2xf32>
    %454 = vector.broadcast %442 : vector<1x2xf32> to vector<8x2xf32>
    %455 = arith.mulf %323, %454 : vector<8x2xf32>
    %456 = arith.addf %453, %455 : vector<8x2xf32>
    %457 = vector.broadcast %439 : vector<1x2xf32> to vector<8x2xf32>
    %458 = arith.mulf %191, %457 : vector<8x2xf32>
    %459 = arith.addf %447, %458 : vector<8x2xf32>
    %460 = vector.broadcast %441 : vector<1x2xf32> to vector<8x2xf32>
    %461 = arith.mulf %279, %460 : vector<8x2xf32>
    %462 = arith.addf %459, %461 : vector<8x2xf32>
    %463 = vector.broadcast %443 : vector<1x2xf32> to vector<8x2xf32>
    %464 = arith.mulf %367, %463 : vector<8x2xf32>
    %465 = arith.addf %462, %464 : vector<8x2xf32>
    %466 = arith.addf %456, %465 : vector<8x2xf32>
    %c106 = arith.constant 106 : index
    %c0_153 = arith.constant 0 : index
    %467 = vector.load %arg2[%c106, %c0_153] : memref<108x2xf32, #tpu.memory_space<vmem>>, vector<1x2xf32>
    %468 = vector.broadcast %467 : vector<1x2xf32> to vector<8x2xf32>
    %469 = arith.addf %466, %468 : vector<8x2xf32>
    %c75 = arith.constant 75 : index
    %c0_154 = arith.constant 0 : index
    %470 = vector.load %arg2[%c75, %c0_154] : memref<108x2xf32, #tpu.memory_space<vmem>>, vector<1x2xf32>
    %c79 = arith.constant 79 : index
    %c0_155 = arith.constant 0 : index
    %471 = vector.load %arg2[%c79, %c0_155] : memref<108x2xf32, #tpu.memory_space<vmem>>, vector<1x2xf32>
    %c83 = arith.constant 83 : index
    %c0_156 = arith.constant 0 : index
    %472 = vector.load %arg2[%c83, %c0_156] : memref<108x2xf32, #tpu.memory_space<vmem>>, vector<1x2xf32>
    %c87 = arith.constant 87 : index
    %c0_157 = arith.constant 0 : index
    %473 = vector.load %arg2[%c87, %c0_157] : memref<108x2xf32, #tpu.memory_space<vmem>>, vector<1x2xf32>
    %c91 = arith.constant 91 : index
    %c0_158 = arith.constant 0 : index
    %474 = vector.load %arg2[%c91, %c0_158] : memref<108x2xf32, #tpu.memory_space<vmem>>, vector<1x2xf32>
    %c95 = arith.constant 95 : index
    %c0_159 = arith.constant 0 : index
    %475 = vector.load %arg2[%c95, %c0_159] : memref<108x2xf32, #tpu.memory_space<vmem>>, vector<1x2xf32>
    %c99 = arith.constant 99 : index
    %c0_160 = arith.constant 0 : index
    %476 = vector.load %arg2[%c99, %c0_160] : memref<108x2xf32, #tpu.memory_space<vmem>>, vector<1x2xf32>
    %c103 = arith.constant 103 : index
    %c0_161 = arith.constant 0 : index
    %477 = vector.load %arg2[%c103, %c0_161] : memref<108x2xf32, #tpu.memory_space<vmem>>, vector<1x2xf32>
    %478 = vector.broadcast %470 : vector<1x2xf32> to vector<8x2xf32>
    %479 = arith.mulf %59, %478 : vector<8x2xf32>
    %480 = vector.broadcast %471 : vector<1x2xf32> to vector<8x2xf32>
    %481 = arith.mulf %103, %480 : vector<8x2xf32>
    %482 = vector.broadcast %472 : vector<1x2xf32> to vector<8x2xf32>
    %483 = arith.mulf %147, %482 : vector<8x2xf32>
    %484 = arith.addf %479, %483 : vector<8x2xf32>
    %485 = vector.broadcast %474 : vector<1x2xf32> to vector<8x2xf32>
    %486 = arith.mulf %235, %485 : vector<8x2xf32>
    %487 = arith.addf %484, %486 : vector<8x2xf32>
    %488 = vector.broadcast %476 : vector<1x2xf32> to vector<8x2xf32>
    %489 = arith.mulf %323, %488 : vector<8x2xf32>
    %490 = arith.addf %487, %489 : vector<8x2xf32>
    %491 = vector.broadcast %473 : vector<1x2xf32> to vector<8x2xf32>
    %492 = arith.mulf %191, %491 : vector<8x2xf32>
    %493 = arith.addf %481, %492 : vector<8x2xf32>
    %494 = vector.broadcast %475 : vector<1x2xf32> to vector<8x2xf32>
    %495 = arith.mulf %279, %494 : vector<8x2xf32>
    %496 = arith.addf %493, %495 : vector<8x2xf32>
    %497 = vector.broadcast %477 : vector<1x2xf32> to vector<8x2xf32>
    %498 = arith.mulf %367, %497 : vector<8x2xf32>
    %499 = arith.addf %496, %498 : vector<8x2xf32>
    %500 = arith.addf %490, %499 : vector<8x2xf32>
    %c107 = arith.constant 107 : index
    %c0_162 = arith.constant 0 : index
    %501 = vector.load %arg2[%c107, %c0_162] : memref<108x2xf32, #tpu.memory_space<vmem>>, vector<1x2xf32>
    %502 = vector.broadcast %501 : vector<1x2xf32> to vector<8x2xf32>
    %503 = arith.addf %500, %502 : vector<8x2xf32>
    %c0_163 = arith.constant 0 : index
    %c0_164 = arith.constant 0 : index
    %c0_165 = arith.constant 0 : index
    %504 = vector.load %arg3[%c0_163, %c0_164, %c0_165] : memref<4x8x2xf32, #tpu.memory_space<vmem>>, vector<1x8x2xf32>
    %505 = vector.shape_cast %504 : vector<1x8x2xf32> to vector<8x2xf32>
    %506 = vector.shape_cast %401 : vector<8x2xf32> to vector<1x8x2xf32>
    tpu.vector_store %arg3[%c0_163, %c0_164, %c0_165], %506 {strides = array<i32>} : memref<4x8x2xf32, #tpu.memory_space<vmem>>, vector<1x8x2xf32>,
    %c1_166 = arith.constant 1 : index
    %c0_167 = arith.constant 0 : index
    %c0_168 = arith.constant 0 : index
    %507 = vector.load %arg3[%c1_166, %c0_167, %c0_168] : memref<4x8x2xf32, #tpu.memory_space<vmem>>, vector<1x8x2xf32>
    %508 = vector.shape_cast %507 : vector<1x8x2xf32> to vector<8x2xf32>
    %509 = vector.shape_cast %435 : vector<8x2xf32> to vector<1x8x2xf32>
    tpu.vector_store %arg3[%c1_166, %c0_167, %c0_168], %509 {strides = array<i32>} : memref<4x8x2xf32, #tpu.memory_space<vmem>>, vector<1x8x2xf32>,
    %c2_169 = arith.constant 2 : index
    %c0_170 = arith.constant 0 : index
    %c0_171 = arith.constant 0 : index
    %510 = vector.load %arg3[%c2_169, %c0_170, %c0_171] : memref<4x8x2xf32, #tpu.memory_space<vmem>>, vector<1x8x2xf32>
    %511 = vector.shape_cast %510 : vector<1x8x2xf32> to vector<8x2xf32>
    %512 = vector.shape_cast %469 : vector<8x2xf32> to vector<1x8x2xf32>
    tpu.vector_store %arg3[%c2_169, %c0_170, %c0_171], %512 {strides = array<i32>} : memref<4x8x2xf32, #tpu.memory_space<vmem>>, vector<1x8x2xf32>,
    %c3_172 = arith.constant 3 : index
    %c0_173 = arith.constant 0 : index
    %c0_174 = arith.constant 0 : index
    %513 = vector.load %arg3[%c3_172, %c0_173, %c0_174] : memref<4x8x2xf32, #tpu.memory_space<vmem>>, vector<1x8x2xf32>
    %514 = vector.shape_cast %513 : vector<1x8x2xf32> to vector<8x2xf32>
    %515 = vector.shape_cast %503 : vector<8x2xf32> to vector<1x8x2xf32>
    tpu.vector_store %arg3[%c3_172, %c0_173, %c0_174], %515 {strides = array<i32>} : memref<4x8x2xf32, #tpu.memory_space<vmem>>, vector<1x8x2xf32>,
    return
  }
  func.func @transform_0(%arg0: i32) -> (i32, i32, i32) {
    %c0_i32 = arith.constant 0 : i32
    %c0_i32_0 = arith.constant 0 : i32
    %c0_i32_1 = arith.constant 0 : i32
    return %c0_i32, %c0_i32_0, %arg0 : i32, i32, i32
  }
  func.func @transform_1(%arg0: i32) -> (i32, i32) {
    %c0_i32 = arith.constant 0 : i32
    %c0_i32_0 = arith.constant 0 : i32
    return %c0_i32, %arg0 : i32, i32
  }
  func.func @transform_2(%arg0: i32) -> (i32, i32, i32) {
    %c0_i32 = arith.constant 0 : i32
    %c0_i32_0 = arith.constant 0 : i32
    %c0_i32_1 = arith.constant 0 : i32
    return %c0_i32, %c0_i32_0, %arg0 : i32, i32, i32
  }
}

</mosaic_0001>

<llo_original>
// kernel: tpu_custom_call.1
$region0: #{tpu_custom_call.1}
  #allocation0 [shape = 'u32[]', space=smem, size = 0x4, offset = 0x4, fixed_abs, tag = 'smem constant byte address 0x4 - core index']
  #allocation1 [shape = 'u32[144,128]{1,0:T(1,128)}', space=vmem, size = 0x12000, scoped, tag = 'internal scratch']
  %s0 = inlined_call_operand.vmem [shape: f32[8,8,2], index: 0, kind: input, shape index: {}]
  %s1 = inlined_call_operand.vmem [shape: f32[108,2], index: 1, kind: input, shape index: {}]
  %s2 = inlined_call_operand.vmem [shape: f32[4,8,2], index: 2, kind: output, shape index: {}]
  %s3 = sld [smem:[#allocation0]]
  $region18: #{tpu_custom_call.1} parent=0
    _
  %s5 = ssub.s32 1, %s3
  %s6 = scalar_select 0, %s5, %s3
  // Predicated region
  $region2: #{tpu_custom_call.1} parent=0 // pred_check
    _
  $region3: #{tpu_custom_call.1} parent=0 // pred_check_branch
    %8 = sbr.rel (0) target = $region5
  $region4: #{tpu_custom_call.1} parent=0 // pred_region
    _
  $region5: #{tpu_custom_call.1} parent=0 // pred_fallthru
    _
  // Predicated region
  $region6: #{tpu_custom_call.1} parent=0 // pred_check
    _
  $region7: #{tpu_custom_call.1} parent=0 // pred_check_branch
    %10 = sbr.rel (0) target = $region9
  $region8: #{tpu_custom_call.1} parent=0 // pred_region
    _
  $region9: #{tpu_custom_call.1} parent=0 // pred_fallthru
    _
  %v11 = vld [vmem:[%s0] sm:$0xff]
  %s12 = scalar_lea.vmem %s0, 8
  %v13 = vld [vmem:[%s12] sm:$0xff]
  %s14 = scalar_lea.vmem %s0, 16
  %v15 = vld [vmem:[%s14] sm:$0xff]
  %s16 = scalar_lea.vmem %s0, 24
  %v17 = vld [vmem:[%s16] sm:$0xff]
  %s18 = scalar_lea.vmem %s0, 32
  %v19 = vld [vmem:[%s18] sm:$0xff]
  %s20 = scalar_lea.vmem %s0, 40
  %v21 = vld [vmem:[%s20] sm:$0xff]
  %s22 = scalar_lea.vmem %s0, 48
  %v23 = vld [vmem:[%s22] sm:$0xff]
  %s24 = scalar_lea.vmem %s0, 56
  %v25 = vld [vmem:[%s24] sm:$0xff]
  %v26 = vld [vmem:[%s1] sm:$0x1]
  %v27 = vld [vmem:[%s1 + $0x8] sm:$0x1]
  %v28 = vld [vmem:[%s1 + $0x10] sm:$0x1]
  %v29 = vld [vmem:[%s1 + $0x18] sm:$0x1]
  %v30 = vld [vmem:[%s1 + $0x20] sm:$0x1]
  %v31 = vld [vmem:[%s1 + $0x28] sm:$0x1]
  %v32 = vld [vmem:[%s1 + $0x30] sm:$0x1]
  %v33 = vld [vmem:[%s1 + $0x38] sm:$0x1]
  %v34 = vlaneseq
  %v35 = vshrl.u32 %v34, 7
  %v36 = vsub.s32 0, %v35
  %v37 = vrot.slane %v26, %v36
  %v38 = vmul.f32 %v11, %v37
  %v39 = vlaneseq
  %v40 = vshrl.u32 %v39, 7
  %v41 = vsub.s32 0, %v40
  %v42 = vrot.slane %v27, %v41
  %v43 = vmul.f32 %v13, %v42
  %v44 = vlaneseq
  %v45 = vshrl.u32 %v44, 7
  %v46 = vsub.s32 0, %v45
  %v47 = vrot.slane %v28, %v46
  %v48 = vmul.f32 %v15, %v47
  %v49 = vadd.f32 %v38, %v48
  %v50 = vlaneseq
  %v51 = vshrl.u32 %v50, 7
  %v52 = vsub.s32 0, %v51
  %v53 = vrot.slane %v30, %v52
  %v54 = vmul.f32 %v19, %v53
  %v55 = vadd.f32 %v49, %v54
  %v56 = vlaneseq
  %v57 = vshrl.u32 %v56, 7
  %v58 = vsub.s32 0, %v57
  %v59 = vrot.slane %v32, %v58
  %v60 = vmul.f32 %v23, %v59
  %v61 = vadd.f32 %v55, %v60
  %v62 = vlaneseq
  %v63 = vshrl.u32 %v62, 7
  %v64 = vsub.s32 0, %v63
  %v65 = vrot.slane %v29, %v64
  %v66 = vmul.f32 %v17, %v65
  %v67 = vadd.f32 %v43, %v66
  %v68 = vlaneseq
  %v69 = vshrl.u32 %v68, 7
  %v70 = vsub.s32 0, %v69
  %v71 = vrot.slane %v31, %v70
  %v72 = vmul.f32 %v21, %v71
  %v73 = vadd.f32 %v67, %v72
  %v74 = vlaneseq
  %v75 = vshrl.u32 %v74, 7
  %v76 = vsub.s32 0, %v75
  %v77 = vrot.slane %v33, %v76
  %v78 = vmul.f32 %v25, %v77
  %v79 = vadd.f32 %v73, %v78
  %v80 = vadd.f32 %v61, %v79
  %v81 = vld [vmem:[%s1 + $0x40] sm:$0x1]
  %v82 = vlaneseq
  %v83 = vshrl.u32 %v82, 7
  %v84 = vsub.s32 0, %v83
  %v85 = vrot.slane %v81, %v84
  %v86 = vadd.f32 %v80, %v85
  %vm87 = vcmp.gt.f32.partialorder %v86, 0.0
  %v88 = vmul.f32 %v86, 1.442695
  %v89 = vpow.pop %v88
  %v90 = vsub.f32 %v89, 1.0
  %v91 = vmul.f32 %v90, 1.6732632
  %v92 = vsel %vm87, %v86, %v91
  %v93 = vmul.f32 %v92, 1.050701
  %v94 = vld [vmem:[%s1 + $0x1] sm:$0x1]
  %v95 = vld [vmem:[%s1 + $0x9] sm:$0x1]
  %v96 = vld [vmem:[%s1 + $0x11] sm:$0x1]
  %v97 = vld [vmem:[%s1 + $0x19] sm:$0x1]
  %v98 = vld [vmem:[%s1 + $0x21] sm:$0x1]
  %v99 = vld [vmem:[%s1 + $0x29] sm:$0x1]
  %v100 = vld [vmem:[%s1 + $0x31] sm:$0x1]
  %v101 = vld [vmem:[%s1 + $0x39] sm:$0x1]
  %v102 = vlaneseq
  %v103 = vshrl.u32 %v102, 7
  %v104 = vsub.s32 0, %v103
  %v105 = vrot.slane %v94, %v104
  %v106 = vmul.f32 %v11, %v105
  %v107 = vlaneseq
  %v108 = vshrl.u32 %v107, 7
  %v109 = vsub.s32 0, %v108
  %v110 = vrot.slane %v95, %v109
  %v111 = vmul.f32 %v13, %v110
  %v112 = vlaneseq
  %v113 = vshrl.u32 %v112, 7
  %v114 = vsub.s32 0, %v113
  %v115 = vrot.slane %v96, %v114
  %v116 = vmul.f32 %v15, %v115
  %v117 = vadd.f32 %v106, %v116
  %v118 = vlaneseq
  %v119 = vshrl.u32 %v118, 7
  %v120 = vsub.s32 0, %v119
  %v121 = vrot.slane %v98, %v120
  %v122 = vmul.f32 %v19, %v121
  %v123 = vadd.f32 %v117, %v122
  %v124 = vlaneseq
  %v125 = vshrl.u32 %v124, 7
  %v126 = vsub.s32 0, %v125
  %v127 = vrot.slane %v100, %v126
  %v128 = vmul.f32 %v23, %v127
  %v129 = vadd.f32 %v123, %v128
  %v130 = vlaneseq
  %v131 = vshrl.u32 %v130, 7
  %v132 = vsub.s32 0, %v131
  %v133 = vrot.slane %v97, %v132
  %v134 = vmul.f32 %v17, %v133
  %v135 = vadd.f32 %v111, %v134
  %v136 = vlaneseq
  %v137 = vshrl.u32 %v136, 7
  %v138 = vsub.s32 0, %v137
  %v139 = vrot.slane %v99, %v138
  %v140 = vmul.f32 %v21, %v139
  %v141 = vadd.f32 %v135, %v140
  %v142 = vlaneseq
  %v143 = vshrl.u32 %v142, 7
  %v144 = vsub.s32 0, %v143
  %v145 = vrot.slane %v101, %v144
  %v146 = vmul.f32 %v25, %v145
  %v147 = vadd.f32 %v141, %v146
  %v148 = vadd.f32 %v129, %v147
  %v149 = vld [vmem:[%s1 + $0x41] sm:$0x1]
  %v150 = vlaneseq
  %v151 = vshrl.u32 %v150, 7
  %v152 = vsub.s32 0, %v151
  %v153 = vrot.slane %v149, %v152
  %v154 = vadd.f32 %v148, %v153
  %vm155 = vcmp.gt.f32.partialorder %v154, 0.0
  %v156 = vmul.f32 %v154, 1.442695
  %v157 = vpow.pop %v156
  %v158 = vsub.f32 %v157, 1.0
  %v159 = vmul.f32 %v158, 1.6732632
  %v160 = vsel %vm155, %v154, %v159
  %v161 = vmul.f32 %v160, 1.050701
  %v162 = vld [vmem:[%s1 + $0x2] sm:$0x1]
  %v163 = vld [vmem:[%s1 + $0xa] sm:$0x1]
  %v164 = vld [vmem:[%s1 + $0x12] sm:$0x1]
  %v165 = vld [vmem:[%s1 + $0x1a] sm:$0x1]
  %v166 = vld [vmem:[%s1 + $0x22] sm:$0x1]
  %v167 = vld [vmem:[%s1 + $0x2a] sm:$0x1]
  %v168 = vld [vmem:[%s1 + $0x32] sm:$0x1]
  %v169 = vld [vmem:[%s1 + $0x3a] sm:$0x1]
  %v170 = vlaneseq
  %v171 = vshrl.u32 %v170, 7
  %v172 = vsub.s32 0, %v171
  %v173 = vrot.slane %v162, %v172
  %v174 = vmul.f32 %v11, %v173
  %v175 = vlaneseq
  %v176 = vshrl.u32 %v175, 7
  %v177 = vsub.s32 0, %v176
  %v178 = vrot.slane %v163, %v177
  %v179 = vmul.f32 %v13, %v178
  %v180 = vlaneseq
  %v181 = vshrl.u32 %v180, 7
  %v182 = vsub.s32 0, %v181
  %v183 = vrot.slane %v164, %v182
  %v184 = vmul.f32 %v15, %v183
  %v185 = vadd.f32 %v174, %v184
  %v186 = vlaneseq
  %v187 = vshrl.u32 %v186, 7
  %v188 = vsub.s32 0, %v187
  %v189 = vrot.slane %v166, %v188
  %v190 = vmul.f32 %v19, %v189
  %v191 = vadd.f32 %v185, %v190
  %v192 = vlaneseq
  %v193 = vshrl.u32 %v192, 7
  %v194 = vsub.s32 0, %v193
  %v195 = vrot.slane %v168, %v194
  %v196 = vmul.f32 %v23, %v195
  %v197 = vadd.f32 %v191, %v196
  %v198 = vlaneseq
  %v199 = vshrl.u32 %v198, 7
  %v200 = vsub.s32 0, %v199
  %v201 = vrot.slane %v165, %v200
  %v202 = vmul.f32 %v17, %v201
  %v203 = vadd.f32 %v179, %v202
  %v204 = vlaneseq
  %v205 = vshrl.u32 %v204, 7
  %v206 = vsub.s32 0, %v205
  %v207 = vrot.slane %v167, %v206
  %v208 = vmul.f32 %v21, %v207
  %v209 = vadd.f32 %v203, %v208
  %v210 = vlaneseq
  %v211 = vshrl.u32 %v210, 7
  %v212 = vsub.s32 0, %v211
  %v213 = vrot.slane %v169, %v212
  %v214 = vmul.f32 %v25, %v213
  %v215 = vadd.f32 %v209, %v214
  %v216 = vadd.f32 %v197, %v215
  %v217 = vld [vmem:[%s1 + $0x42] sm:$0x1]
  %v218 = vlaneseq
  %v219 = vshrl.u32 %v218, 7
  %v220 = vsub.s32 0, %v219
  %v221 = vrot.slane %v217, %v220
  %v222 = vadd.f32 %v216, %v221
  %vm223 = vcmp.gt.f32.partialorder %v222, 0.0
  %v224 = vmul.f32 %v222, 1.442695
  %v225 = vpow.pop %v224
  %v226 = vsub.f32 %v225, 1.0
  %v227 = vmul.f32 %v226, 1.6732632
  %v228 = vsel %vm223, %v222, %v227
  %v229 = vmul.f32 %v228, 1.050701
  %v230 = vld [vmem:[%s1 + $0x3] sm:$0x1]
  %v231 = vld [vmem:[%s1 + $0xb] sm:$0x1]
  %v232 = vld [vmem:[%s1 + $0x13] sm:$0x1]
  %v233 = vld [vmem:[%s1 + $0x1b] sm:$0x1]
  %v234 = vld [vmem:[%s1 + $0x23] sm:$0x1]
  %v235 = vld [vmem:[%s1 + $0x2b] sm:$0x1]
  %v236 = vld [vmem:[%s1 + $0x33] sm:$0x1]
  %v237 = vld [vmem:[%s1 + $0x3b] sm:$0x1]
  %v238 = vlaneseq
  %v239 = vshrl.u32 %v238, 7
  %v240 = vsub.s32 0, %v239
  %v241 = vrot.slane %v230, %v240
  %v242 = vmul.f32 %v11, %v241
  %v243 = vlaneseq
  %v244 = vshrl.u32 %v243, 7
  %v245 = vsub.s32 0, %v244
  %v246 = vrot.slane %v231, %v245
  %v247 = vmul.f32 %v13, %v246
  %v248 = vlaneseq
  %v249 = vshrl.u32 %v248, 7
  %v250 = vsub.s32 0, %v249
  %v251 = vrot.slane %v232, %v250
  %v252 = vmul.f32 %v15, %v251
  %v253 = vadd.f32 %v242, %v252
  %v254 = vlaneseq
  %v255 = vshrl.u32 %v254, 7
  %v256 = vsub.s32 0, %v255
  %v257 = vrot.slane %v234, %v256
  %v258 = vmul.f32 %v19, %v257
  %v259 = vadd.f32 %v253, %v258
  %v260 = vlaneseq
  %v261 = vshrl.u32 %v260, 7
  %v262 = vsub.s32 0, %v261
  %v263 = vrot.slane %v236, %v262
  %v264 = vmul.f32 %v23, %v263
  %v265 = vadd.f32 %v259, %v264
  %v266 = vlaneseq
  %v267 = vshrl.u32 %v266, 7
  %v268 = vsub.s32 0, %v267
  %v269 = vrot.slane %v233, %v268
  %v270 = vmul.f32 %v17, %v269
  %v271 = vadd.f32 %v247, %v270
  %v272 = vlaneseq
  %v273 = vshrl.u32 %v272, 7
  %v274 = vsub.s32 0, %v273
  %v275 = vrot.slane %v235, %v274
  %v276 = vmul.f32 %v21, %v275
  %v277 = vadd.f32 %v271, %v276
  %v278 = vlaneseq
  %v279 = vshrl.u32 %v278, 7
  %v280 = vsub.s32 0, %v279
  %v281 = vrot.slane %v237, %v280
  %v282 = vmul.f32 %v25, %v281
  %v283 = vadd.f32 %v277, %v282
  %v284 = vadd.f32 %v265, %v283
  %v285 = vld [vmem:[%s1 + $0x43] sm:$0x1]
  %v286 = vlaneseq
  %v287 = vshrl.u32 %v286, 7
  %v288 = vsub.s32 0, %v287
  %v289 = vrot.slane %v285, %v288
  %v290 = vadd.f32 %v284, %v289
  %vm291 = vcmp.gt.f32.partialorder %v290, 0.0
  %v292 = vmul.f32 %v290, 1.442695
  %v293 = vpow.pop %v292
  %v294 = vsub.f32 %v293, 1.0
  %v295 = vmul.f32 %v294, 1.6732632
  %v296 = vsel %vm291, %v290, %v295
  %v297 = vmul.f32 %v296, 1.050701
  %v298 = vld [vmem:[%s1 + $0x4] sm:$0x1]
  %v299 = vld [vmem:[%s1 + $0xc] sm:$0x1]
  %v300 = vld [vmem:[%s1 + $0x14] sm:$0x1]
  %v301 = vld [vmem:[%s1 + $0x1c] sm:$0x1]
  %v302 = vld [vmem:[%s1 + $0x24] sm:$0x1]
  %v303 = vld [vmem:[%s1 + $0x2c] sm:$0x1]
  %v304 = vld [vmem:[%s1 + $0x34] sm:$0x1]
  %v305 = vld [vmem:[%s1 + $0x3c] sm:$0x1]
  %v306 = vlaneseq
  %v307 = vshrl.u32 %v306, 7
  %v308 = vsub.s32 0, %v307
  %v309 = vrot.slane %v298, %v308
  %v310 = vmul.f32 %v11, %v309
  %v311 = vlaneseq
  %v312 = vshrl.u32 %v311, 7
  %v313 = vsub.s32 0, %v312
  %v314 = vrot.slane %v299, %v313
  %v315 = vmul.f32 %v13, %v314
  %v316 = vlaneseq
  %v317 = vshrl.u32 %v316, 7
  %v318 = vsub.s32 0, %v317
  %v319 = vrot.slane %v300, %v318
  %v320 = vmul.f32 %v15, %v319
  %v321 = vadd.f32 %v310, %v320
  %v322 = vlaneseq
  %v323 = vshrl.u32 %v322, 7
  %v324 = vsub.s32 0, %v323
  %v325 = vrot.slane %v302, %v324
  %v326 = vmul.f32 %v19, %v325
  %v327 = vadd.f32 %v321, %v326
  %v328 = vlaneseq
  %v329 = vshrl.u32 %v328, 7
  %v330 = vsub.s32 0, %v329
  %v331 = vrot.slane %v304, %v330
  %v332 = vmul.f32 %v23, %v331
  %v333 = vadd.f32 %v327, %v332
  %v334 = vlaneseq
  %v335 = vshrl.u32 %v334, 7
  %v336 = vsub.s32 0, %v335
  %v337 = vrot.slane %v301, %v336
  %v338 = vmul.f32 %v17, %v337
  %v339 = vadd.f32 %v315, %v338
  %v340 = vlaneseq
  %v341 = vshrl.u32 %v340, 7
  %v342 = vsub.s32 0, %v341
  %v343 = vrot.slane %v303, %v342
  %v344 = vmul.f32 %v21, %v343
  %v345 = vadd.f32 %v339, %v344
  %v346 = vlaneseq
  %v347 = vshrl.u32 %v346, 7
  %v348 = vsub.s32 0, %v347
  %v349 = vrot.slane %v305, %v348
  %v350 = vmul.f32 %v25, %v349
  %v351 = vadd.f32 %v345, %v350
  %v352 = vadd.f32 %v333, %v351
  %v353 = vld [vmem:[%s1 + $0x44] sm:$0x1]
  %v354 = vlaneseq
  %v355 = vshrl.u32 %v354, 7
  %v356 = vsub.s32 0, %v355
  %v357 = vrot.slane %v353, %v356
  %v358 = vadd.f32 %v352, %v357
  %vm359 = vcmp.gt.f32.partialorder %v358, 0.0
  %v360 = vmul.f32 %v358, 1.442695
  %v361 = vpow.pop %v360
  %v362 = vsub.f32 %v361, 1.0
  %v363 = vmul.f32 %v362, 1.6732632
  %v364 = vsel %vm359, %v358, %v363
  %v365 = vmul.f32 %v364, 1.050701
  %v366 = vld [vmem:[%s1 + $0x5] sm:$0x1]
  %v367 = vld [vmem:[%s1 + $0xd] sm:$0x1]
  %v368 = vld [vmem:[%s1 + $0x15] sm:$0x1]
  %v369 = vld [vmem:[%s1 + $0x1d] sm:$0x1]
  %v370 = vld [vmem:[%s1 + $0x25] sm:$0x1]
  %v371 = vld [vmem:[%s1 + $0x2d] sm:$0x1]
  %v372 = vld [vmem:[%s1 + $0x35] sm:$0x1]
  %v373 = vld [vmem:[%s1 + $0x3d] sm:$0x1]
  %v374 = vlaneseq
  %v375 = vshrl.u32 %v374, 7
  %v376 = vsub.s32 0, %v375
  %v377 = vrot.slane %v366, %v376
  %v378 = vmul.f32 %v11, %v377
  %v379 = vlaneseq
  %v380 = vshrl.u32 %v379, 7
  %v381 = vsub.s32 0, %v380
  %v382 = vrot.slane %v367, %v381
  %v383 = vmul.f32 %v13, %v382
  %v384 = vlaneseq
  %v385 = vshrl.u32 %v384, 7
  %v386 = vsub.s32 0, %v385
  %v387 = vrot.slane %v368, %v386
  %v388 = vmul.f32 %v15, %v387
  %v389 = vadd.f32 %v378, %v388
  %v390 = vlaneseq
  %v391 = vshrl.u32 %v390, 7
  %v392 = vsub.s32 0, %v391
  %v393 = vrot.slane %v370, %v392
  %v394 = vmul.f32 %v19, %v393
  %v395 = vadd.f32 %v389, %v394
  %v396 = vlaneseq
  %v397 = vshrl.u32 %v396, 7
  %v398 = vsub.s32 0, %v397
  %v399 = vrot.slane %v372, %v398
  %v400 = vmul.f32 %v23, %v399
  %v401 = vadd.f32 %v395, %v400
  %v402 = vlaneseq
  %v403 = vshrl.u32 %v402, 7
  %v404 = vsub.s32 0, %v403
  %v405 = vrot.slane %v369, %v404
  %v406 = vmul.f32 %v17, %v405
  %v407 = vadd.f32 %v383, %v406
  %v408 = vlaneseq
  %v409 = vshrl.u32 %v408, 7
  %v410 = vsub.s32 0, %v409
  %v411 = vrot.slane %v371, %v410
  %v412 = vmul.f32 %v21, %v411
  %v413 = vadd.f32 %v407, %v412
  %v414 = vlaneseq
  %v415 = vshrl.u32 %v414, 7
  %v416 = vsub.s32 0, %v415
  %v417 = vrot.slane %v373, %v416
  %v418 = vmul.f32 %v25, %v417
  %v419 = vadd.f32 %v413, %v418
  %v420 = vadd.f32 %v401, %v419
  %v421 = vld [vmem:[%s1 + $0x45] sm:$0x1]
  %v422 = vlaneseq
  %v423 = vshrl.u32 %v422, 7
  %v424 = vsub.s32 0, %v423
  %v425 = vrot.slane %v421, %v424
  %v426 = vadd.f32 %v420, %v425
  %vm427 = vcmp.gt.f32.partialorder %v426, 0.0
  %v428 = vmul.f32 %v426, 1.442695
  %v429 = vpow.pop %v428
  %v430 = vsub.f32 %v429, 1.0
  %v431 = vmul.f32 %v430, 1.6732632
  %v432 = vsel %vm427, %v426, %v431
  %v433 = vmul.f32 %v432, 1.050701
  %v434 = vld [vmem:[%s1 + $0x6] sm:$0x1]
  %v435 = vld [vmem:[%s1 + $0xe] sm:$0x1]
  %v436 = vld [vmem:[%s1 + $0x16] sm:$0x1]
  %v437 = vld [vmem:[%s1 + $0x1e] sm:$0x1]
  %v438 = vld [vmem:[%s1 + $0x26] sm:$0x1]
  %v439 = vld [vmem:[%s1 + $0x2e] sm:$0x1]
  %v440 = vld [vmem:[%s1 + $0x36] sm:$0x1]
  %v441 = vld [vmem:[%s1 + $0x3e] sm:$0x1]
  %v442 = vlaneseq
  %v443 = vshrl.u32 %v442, 7
  %v444 = vsub.s32 0, %v443
  %v445 = vrot.slane %v434, %v444
  %v446 = vmul.f32 %v11, %v445
  %v447 = vlaneseq
  %v448 = vshrl.u32 %v447, 7
  %v449 = vsub.s32 0, %v448
  %v450 = vrot.slane %v435, %v449
  %v451 = vmul.f32 %v13, %v450
  %v452 = vlaneseq
  %v453 = vshrl.u32 %v452, 7
  %v454 = vsub.s32 0, %v453
  %v455 = vrot.slane %v436, %v454
  %v456 = vmul.f32 %v15, %v455
  %v457 = vadd.f32 %v446, %v456
  %v458 = vlaneseq
  %v459 = vshrl.u32 %v458, 7
  %v460 = vsub.s32 0, %v459
  %v461 = vrot.slane %v438, %v460
  %v462 = vmul.f32 %v19, %v461
  %v463 = vadd.f32 %v457, %v462
  %v464 = vlaneseq
  %v465 = vshrl.u32 %v464, 7
  %v466 = vsub.s32 0, %v465
  %v467 = vrot.slane %v440, %v466
  %v468 = vmul.f32 %v23, %v467
  %v469 = vadd.f32 %v463, %v468
  %v470 = vlaneseq
  %v471 = vshrl.u32 %v470, 7
  %v472 = vsub.s32 0, %v471
  %v473 = vrot.slane %v437, %v472
  %v474 = vmul.f32 %v17, %v473
  %v475 = vadd.f32 %v451, %v474
  %v476 = vlaneseq
  %v477 = vshrl.u32 %v476, 7
  %v478 = vsub.s32 0, %v477
  %v479 = vrot.slane %v439, %v478
  %v480 = vmul.f32 %v21, %v479
  %v481 = vadd.f32 %v475, %v480
  %v482 = vlaneseq
  %v483 = vshrl.u32 %v482, 7
  %v484 = vsub.s32 0, %v483
  %v485 = vrot.slane %v441, %v484
  %v486 = vmul.f32 %v25, %v485
  %v487 = vadd.f32 %v481, %v486
  %v488 = vadd.f32 %v469, %v487
  %v489 = vld [vmem:[%s1 + $0x46] sm:$0x1]
  %v490 = vlaneseq
  %v491 = vshrl.u32 %v490, 7
  %v492 = vsub.s32 0, %v491
  %v493 = vrot.slane %v489, %v492
  %v494 = vadd.f32 %v488, %v493
  %vm495 = vcmp.gt.f32.partialorder %v494, 0.0
  %v496 = vmul.f32 %v494, 1.442695
  %v497 = vpow.pop %v496
  %v498 = vsub.f32 %v497, 1.0
  %v499 = vmul.f32 %v498, 1.6732632
  %v500 = vsel %vm495, %v494, %v499
  %v501 = vmul.f32 %v500, 1.050701
  %v502 = vld [vmem:[%s1 + $0x7] sm:$0x1]
  %v503 = vld [vmem:[%s1 + $0xf] sm:$0x1]
  %v504 = vld [vmem:[%s1 + $0x17] sm:$0x1]
  %v505 = vld [vmem:[%s1 + $0x1f] sm:$0x1]
  %v506 = vld [vmem:[%s1 + $0x27] sm:$0x1]
  %v507 = vld [vmem:[%s1 + $0x2f] sm:$0x1]
  %v508 = vld [vmem:[%s1 + $0x37] sm:$0x1]
  %v509 = vld [vmem:[%s1 + $0x3f] sm:$0x1]
  %v510 = vlaneseq
  %v511 = vshrl.u32 %v510, 7
  %v512 = vsub.s32 0, %v511
  %v513 = vrot.slane %v502, %v512
  %v514 = vmul.f32 %v11, %v513
  %v515 = vlaneseq
  %v516 = vshrl.u32 %v515, 7
  %v517 = vsub.s32 0, %v516
  %v518 = vrot.slane %v503, %v517
  %v519 = vmul.f32 %v13, %v518
  %v520 = vlaneseq
  %v521 = vshrl.u32 %v520, 7
  %v522 = vsub.s32 0, %v521
  %v523 = vrot.slane %v504, %v522
  %v524 = vmul.f32 %v15, %v523
  %v525 = vadd.f32 %v514, %v524
  %v526 = vlaneseq
  %v527 = vshrl.u32 %v526, 7
  %v528 = vsub.s32 0, %v527
  %v529 = vrot.slane %v506, %v528
  %v530 = vmul.f32 %v19, %v529
  %v531 = vadd.f32 %v525, %v530
  %v532 = vlaneseq
  %v533 = vshrl.u32 %v532, 7
  %v534 = vsub.s32 0, %v533
  %v535 = vrot.slane %v508, %v534
  %v536 = vmul.f32 %v23, %v535
  %v537 = vadd.f32 %v531, %v536
  %v538 = vlaneseq
  %v539 = vshrl.u32 %v538, 7
  %v540 = vsub.s32 0, %v539
  %v541 = vrot.slane %v505, %v540
  %v542 = vmul.f32 %v17, %v541
  %v543 = vadd.f32 %v519, %v542
  %v544 = vlaneseq
  %v545 = vshrl.u32 %v544, 7
  %v546 = vsub.s32 0, %v545
  %v547 = vrot.slane %v507, %v546
  %v548 = vmul.f32 %v21, %v547
  %v549 = vadd.f32 %v543, %v548
  %v550 = vlaneseq
  %v551 = vshrl.u32 %v550, 7
  %v552 = vsub.s32 0, %v551
  %v553 = vrot.slane %v509, %v552
  %v554 = vmul.f32 %v25, %v553
  %v555 = vadd.f32 %v549, %v554
  %v556 = vadd.f32 %v537, %v555
  %v557 = vld [vmem:[%s1 + $0x47] sm:$0x1]
  %v558 = vlaneseq
  %v559 = vshrl.u32 %v558, 7
  %v560 = vsub.s32 0, %v559
  %v561 = vrot.slane %v557, %v560
  %v562 = vadd.f32 %v556, %v561
  %vm563 = vcmp.gt.f32.partialorder %v562, 0.0
  %v564 = vmul.f32 %v562, 1.442695
  %v565 = vpow.pop %v564
  %v566 = vsub.f32 %v565, 1.0
  %v567 = vmul.f32 %v566, 1.6732632
  %v568 = vsel %vm563, %v562, %v567
  %v569 = vmul.f32 %v568, 1.050701
  %v570 = vld [vmem:[%s1 + $0x48] sm:$0x1]
  %v571 = vld [vmem:[%s1 + $0x4c] sm:$0x1]
  %v572 = vld [vmem:[%s1 + $0x50] sm:$0x1]
  %v573 = vld [vmem:[%s1 + $0x54] sm:$0x1]
  %v574 = vld [vmem:[%s1 + $0x58] sm:$0x1]
  %v575 = vld [vmem:[%s1 + $0x5c] sm:$0x1]
  %v576 = vld [vmem:[%s1 + $0x60] sm:$0x1]
  %v577 = vld [vmem:[%s1 + $0x64] sm:$0x1]
  %v578 = vlaneseq
  %v579 = vshrl.u32 %v578, 7
  %v580 = vsub.s32 0, %v579
  %v581 = vrot.slane %v570, %v580
  %v582 = vmul.f32 %v93, %v581
  %v583 = vlaneseq
  %v584 = vshrl.u32 %v583, 7
  %v585 = vsub.s32 0, %v584
  %v586 = vrot.slane %v571, %v585
  %v587 = vmul.f32 %v161, %v586
  %v588 = vlaneseq
  %v589 = vshrl.u32 %v588, 7
  %v590 = vsub.s32 0, %v589
  %v591 = vrot.slane %v572, %v590
  %v592 = vmul.f32 %v229, %v591
  %v593 = vadd.f32 %v582, %v592
  %v594 = vlaneseq
  %v595 = vshrl.u32 %v594, 7
  %v596 = vsub.s32 0, %v595
  %v597 = vrot.slane %v574, %v596
  %v598 = vmul.f32 %v365, %v597
  %v599 = vadd.f32 %v593, %v598
  %v600 = vlaneseq
  %v601 = vshrl.u32 %v600, 7
  %v602 = vsub.s32 0, %v601
  %v603 = vrot.slane %v576, %v602
  %v604 = vmul.f32 %v501, %v603
  %v605 = vadd.f32 %v599, %v604
  %v606 = vlaneseq
  %v607 = vshrl.u32 %v606, 7
  %v608 = vsub.s32 0, %v607
  %v609 = vrot.slane %v573, %v608
  %v610 = vmul.f32 %v297, %v609
  %v611 = vadd.f32 %v587, %v610
  %v612 = vlaneseq
  %v613 = vshrl.u32 %v612, 7
  %v614 = vsub.s32 0, %v613
  %v615 = vrot.slane %v575, %v614
  %v616 = vmul.f32 %v433, %v615
  %v617 = vadd.f32 %v611, %v616
  %v618 = vlaneseq
  %v619 = vshrl.u32 %v618, 7
  %v620 = vsub.s32 0, %v619
  %v621 = vrot.slane %v577, %v620
  %v622 = vmul.f32 %v569, %v621
  %v623 = vadd.f32 %v617, %v622
  %v624 = vadd.f32 %v605, %v623
  %v625 = vld [vmem:[%s1 + $0x68] sm:$0x1]
  %v626 = vlaneseq
  %v627 = vshrl.u32 %v626, 7
  %v628 = vsub.s32 0, %v627
  %v629 = vrot.slane %v625, %v628
  %v630 = vadd.f32 %v624, %v629
  %v631 = vld [vmem:[%s1 + $0x49] sm:$0x1]
  %v632 = vld [vmem:[%s1 + $0x4d] sm:$0x1]
  %v633 = vld [vmem:[%s1 + $0x51] sm:$0x1]
  %v634 = vld [vmem:[%s1 + $0x55] sm:$0x1]
  %v635 = vld [vmem:[%s1 + $0x59] sm:$0x1]
  %v636 = vld [vmem:[%s1 + $0x5d] sm:$0x1]
  %v637 = vld [vmem:[%s1 + $0x61] sm:$0x1]
  %v638 = vld [vmem:[%s1 + $0x65] sm:$0x1]
  %v639 = vlaneseq
  %v640 = vshrl.u32 %v639, 7
  %v641 = vsub.s32 0, %v640
  %v642 = vrot.slane %v631, %v641
  %v643 = vmul.f32 %v93, %v642
  %v644 = vlaneseq
  %v645 = vshrl.u32 %v644, 7
  %v646 = vsub.s32 0, %v645
  %v647 = vrot.slane %v632, %v646
  %v648 = vmul.f32 %v161, %v647
  %v649 = vlaneseq
  %v650 = vshrl.u32 %v649, 7
  %v651 = vsub.s32 0, %v650
  %v652 = vrot.slane %v633, %v651
  %v653 = vmul.f32 %v229, %v652
  %v654 = vadd.f32 %v643, %v653
  %v655 = vlaneseq
  %v656 = vshrl.u32 %v655, 7
  %v657 = vsub.s32 0, %v656
  %v658 = vrot.slane %v635, %v657
  %v659 = vmul.f32 %v365, %v658
  %v660 = vadd.f32 %v654, %v659
  %v661 = vlaneseq
  %v662 = vshrl.u32 %v661, 7
  %v663 = vsub.s32 0, %v662
  %v664 = vrot.slane %v637, %v663
  %v665 = vmul.f32 %v501, %v664
  %v666 = vadd.f32 %v660, %v665
  %v667 = vlaneseq
  %v668 = vshrl.u32 %v667, 7
  %v669 = vsub.s32 0, %v668
  %v670 = vrot.slane %v634, %v669
  %v671 = vmul.f32 %v297, %v670
  %v672 = vadd.f32 %v648, %v671
  %v673 = vlaneseq
  %v674 = vshrl.u32 %v673, 7
  %v675 = vsub.s32 0, %v674
  %v676 = vrot.slane %v636, %v675
  %v677 = vmul.f32 %v433, %v676
  %v678 = vadd.f32 %v672, %v677
  %v679 = vlaneseq
  %v680 = vshrl.u32 %v679, 7
  %v681 = vsub.s32 0, %v680
  %v682 = vrot.slane %v638, %v681
  %v683 = vmul.f32 %v569, %v682
  %v684 = vadd.f32 %v678, %v683
  %v685 = vadd.f32 %v666, %v684
  %v686 = vld [vmem:[%s1 + $0x69] sm:$0x1]
  %v687 = vlaneseq
  %v688 = vshrl.u32 %v687, 7
  %v689 = vsub.s32 0, %v688
  %v690 = vrot.slane %v686, %v689
  %v691 = vadd.f32 %v685, %v690
  %v692 = vld [vmem:[%s1 + $0x4a] sm:$0x1]
  %v693 = vld [vmem:[%s1 + $0x4e] sm:$0x1]
  %v694 = vld [vmem:[%s1 + $0x52] sm:$0x1]
  %v695 = vld [vmem:[%s1 + $0x56] sm:$0x1]
  %v696 = vld [vmem:[%s1 + $0x5a] sm:$0x1]
  %v697 = vld [vmem:[%s1 + $0x5e] sm:$0x1]
  %v698 = vld [vmem:[%s1 + $0x62] sm:$0x1]
  %v699 = vld [vmem:[%s1 + $0x66] sm:$0x1]
  %v700 = vlaneseq
  %v701 = vshrl.u32 %v700, 7
  %v702 = vsub.s32 0, %v701
  %v703 = vrot.slane %v692, %v702
  %v704 = vmul.f32 %v93, %v703
  %v705 = vlaneseq
  %v706 = vshrl.u32 %v705, 7
  %v707 = vsub.s32 0, %v706
  %v708 = vrot.slane %v693, %v707
  %v709 = vmul.f32 %v161, %v708
  %v710 = vlaneseq
  %v711 = vshrl.u32 %v710, 7
  %v712 = vsub.s32 0, %v711
  %v713 = vrot.slane %v694, %v712
  %v714 = vmul.f32 %v229, %v713
  %v715 = vadd.f32 %v704, %v714
  %v716 = vlaneseq
  %v717 = vshrl.u32 %v716, 7
  %v718 = vsub.s32 0, %v717
  %v719 = vrot.slane %v696, %v718
  %v720 = vmul.f32 %v365, %v719
  %v721 = vadd.f32 %v715, %v720
  %v722 = vlaneseq
  %v723 = vshrl.u32 %v722, 7
  %v724 = vsub.s32 0, %v723
  %v725 = vrot.slane %v698, %v724
  %v726 = vmul.f32 %v501, %v725
  %v727 = vadd.f32 %v721, %v726
  %v728 = vlaneseq
  %v729 = vshrl.u32 %v728, 7
  %v730 = vsub.s32 0, %v729
  %v731 = vrot.slane %v695, %v730
  %v732 = vmul.f32 %v297, %v731
  %v733 = vadd.f32 %v709, %v732
  %v734 = vlaneseq
  %v735 = vshrl.u32 %v734, 7
  %v736 = vsub.s32 0, %v735
  %v737 = vrot.slane %v697, %v736
  %v738 = vmul.f32 %v433, %v737
  %v739 = vadd.f32 %v733, %v738
  %v740 = vlaneseq
  %v741 = vshrl.u32 %v740, 7
  %v742 = vsub.s32 0, %v741
  %v743 = vrot.slane %v699, %v742
  %v744 = vmul.f32 %v569, %v743
  %v745 = vadd.f32 %v739, %v744
  %v746 = vadd.f32 %v727, %v745
  %v747 = vld [vmem:[%s1 + $0x6a] sm:$0x1]
  %v748 = vlaneseq
  %v749 = vshrl.u32 %v748, 7
  %v750 = vsub.s32 0, %v749
  %v751 = vrot.slane %v747, %v750
  %v752 = vadd.f32 %v746, %v751
  %v753 = vld [vmem:[%s1 + $0x4b] sm:$0x1]
  %v754 = vld [vmem:[%s1 + $0x4f] sm:$0x1]
  %v755 = vld [vmem:[%s1 + $0x53] sm:$0x1]
  %v756 = vld [vmem:[%s1 + $0x57] sm:$0x1]
  %v757 = vld [vmem:[%s1 + $0x5b] sm:$0x1]
  %v758 = vld [vmem:[%s1 + $0x5f] sm:$0x1]
  %v759 = vld [vmem:[%s1 + $0x63] sm:$0x1]
  %v760 = vld [vmem:[%s1 + $0x67] sm:$0x1]
  %v761 = vlaneseq
  %v762 = vshrl.u32 %v761, 7
  %v763 = vsub.s32 0, %v762
  %v764 = vrot.slane %v753, %v763
  %v765 = vmul.f32 %v93, %v764
  %v766 = vlaneseq
  %v767 = vshrl.u32 %v766, 7
  %v768 = vsub.s32 0, %v767
  %v769 = vrot.slane %v754, %v768
  %v770 = vmul.f32 %v161, %v769
  %v771 = vlaneseq
  %v772 = vshrl.u32 %v771, 7
  %v773 = vsub.s32 0, %v772
  %v774 = vrot.slane %v755, %v773
  %v775 = vmul.f32 %v229, %v774
  %v776 = vadd.f32 %v765, %v775
  %v777 = vlaneseq
  %v778 = vshrl.u32 %v777, 7
  %v779 = vsub.s32 0, %v778
  %v780 = vrot.slane %v757, %v779
  %v781 = vmul.f32 %v365, %v780
  %v782 = vadd.f32 %v776, %v781
  %v783 = vlaneseq
  %v784 = vshrl.u32 %v783, 7
  %v785 = vsub.s32 0, %v784
  %v786 = vrot.slane %v759, %v785
  %v787 = vmul.f32 %v501, %v786
  %v788 = vadd.f32 %v782, %v787
  %v789 = vlaneseq
  %v790 = vshrl.u32 %v789, 7
  %v791 = vsub.s32 0, %v790
  %v792 = vrot.slane %v756, %v791
  %v793 = vmul.f32 %v297, %v792
  %v794 = vadd.f32 %v770, %v793
  %v795 = vlaneseq
  %v796 = vshrl.u32 %v795, 7
  %v797 = vsub.s32 0, %v796
  %v798 = vrot.slane %v758, %v797
  %v799 = vmul.f32 %v433, %v798
  %v800 = vadd.f32 %v794, %v799
  %v801 = vlaneseq
  %v802 = vshrl.u32 %v801, 7
  %v803 = vsub.s32 0, %v802
  %v804 = vrot.slane %v760, %v803
  %v805 = vmul.f32 %v569, %v804
  %v806 = vadd.f32 %v800, %v805
  %v807 = vadd.f32 %v788, %v806
  %v808 = vld [vmem:[%s1 + $0x6b] sm:$0x1]
  %v809 = vlaneseq
  %v810 = vshrl.u32 %v809, 7
  %v811 = vsub.s32 0, %v810
  %v812 = vrot.slane %v808, %v811
  %v813 = vadd.f32 %v807, %v812
  %vm814 = vcmask 15360
  %815 = vst.msk [vmem:[%s2] sm:$0xff] %vm814, %v630
  %s816 = scalar_lea.vmem %s2, 8
  %817 = vst.msk [vmem:[%s816] sm:$0xff] %vm814, %v691
  %s818 = scalar_lea.vmem %s2, 16
  %819 = vst.msk [vmem:[%s818] sm:$0xff] %vm814, %v752
  %s820 = scalar_lea.vmem %s2, 24
  %821 = vst.msk [vmem:[%s820] sm:$0xff] %vm814, %v813
  // Predicated region
  $region10: #{tpu_custom_call.1} parent=0 // pred_check
    _
  $region11: #{tpu_custom_call.1} parent=0 // pred_check_branch
    %823 = sbr.rel (0) target = $region13
  $region12: #{tpu_custom_call.1} parent=0 // pred_region
    _
  $region13: #{tpu_custom_call.1} parent=0 // pred_fallthru
    _
  // Predicated region
  $region14: #{tpu_custom_call.1} parent=0 // pred_check
    _
  $region15: #{tpu_custom_call.1} parent=0 // pred_check_branch
    %825 = sbr.rel (0) target = $region17
  $region16: #{tpu_custom_call.1} parent=0 // pred_region
    _
  $region17: #{tpu_custom_call.1} parent=0 // pred_fallthru
    _

</llo_original>
